<compile_context>
chip_gen: v5e
topology: v5e:2x2
jax: 0.10.0
libtpu: 0.0.40
codegen_flags: <defaults>
</compile_context>

<pallas_src>
import functools
import math

import jax
import jax.numpy as jnp
from jax.experimental import pallas as pl
from jax.experimental.pallas import tpu as pltpu


def _multi_bias_conv_kernel(x_ref, w_ref, bias_ref, o_ref, *,
                            kw_size, width, n_bias):
    # x_ref:    (TB, Cin, Lp)        flattened (padded) spatial on the lane axis
    # w_ref:    (KH*KW, Cmid, Cin)   tap-major weights
    # bias_ref: (Cout, 1)            per-output-channel bias column
    # o_ref:    (TB, Cout, Lo)       Lo = Ho * W (cols wo >= Wo are wrap-around
    #                                garbage, sliced off in the wrapper)
    tb = x_ref.shape[0]
    n_taps, c_mid, _ = w_ref.shape
    lo = o_ref.shape[-1]

    bias_col = bias_ref[...]                       # (Cout, 1), broadcasts over lanes

    for b in range(tb):                            # static unrolled batch-in-tile loop
        acc = jnp.zeros((c_mid, lo), jnp.float32)
        for t in range(n_taps):                    # static unrolled KHxKW tap loop
            kh = t // kw_size
            kw = t % kw_size
            off = kh * width + kw                  # static lane offset for this tap
            patch = x_ref[b, :, off:off + lo]      # (Cin, Lo)
            acc = acc + jnp.dot(w_ref[t], patch,
                                preferred_element_type=jnp.float32,
                                precision=jax.lax.Precision.HIGHEST)
        # multi-bias concat along channels, then one lane-dense store
        full = jnp.concatenate([acc] * n_bias, axis=0) + bias_col   # (Cout, Lo)
        o_ref[b] = full.astype(o_ref.dtype)


def multi_bias_conv(x, weight, bias, *, stride=1, pad=0, batch_tile=None):
    """Pallas forward of MultiBiasConv.

    x:      (B, Cin, H, W) float32
    weight: (Cmid, Cin, KH, KW)   (Cmid = out_channels / n_bias, no conv bias)
    bias:   (n_bias,) scalars
    returns (B, Cmid * n_bias, Ho, Wo)
    """
    # TODO(synk): stride > 1 would need strided lane slicing of the flat slab.
    assert stride == 1, "only stride=1 (the module default) is implemented"
    n_bias = int(bias.shape[0])
    c_mid, cin_w, KH, KW = weight.shape
    Cout = c_mid * n_bias

    if pad:
        x = jnp.pad(x, ((0, 0), (0, 0), (pad, pad), (pad, pad)))
    B, Cin, H, W = x.shape
    assert Cin == cin_w

    Ho = H - KH + 1
    Wo = W - KW + 1
    Lo = Ho * W                      # flat output row length (valid cols: 0..Wo-1)
    Lp = H * W + (KW - 1)            # padded flat input so every tap slice is in-bounds

    # Lane-dense flattened input (pad values never reach a valid output column).
    x_flat = jnp.pad(x.reshape(B, Cin, H * W),
                     ((0, 0), (0, 0), (0, Lp - H * W)))

    # Tap-major weights: one 2-D MXU matmul per tap inside the kernel.
    w_taps = jnp.transpose(weight, (2, 3, 0, 1)).reshape(KH * KW, c_mid, Cin)

    # Per-output-channel bias column: channel c gets bias[c // Cmid].
    bias_col = jnp.repeat(bias, c_mid).reshape(Cout, 1).astype(jnp.float32)

    # Batch tiling: tile <= ~2 MiB, keep >= 2 grid steps when B >= 2 (megacore).
    if batch_tile is None:
        per_elem_bytes = Cin * Lp * x.dtype.itemsize
        cap = max(1, (2 << 20) // per_elem_bytes)
        if B >= 2:
            cap = min(cap, max(1, B // 2))
        batch_tile = max(d for d in range(1, B + 1) if B % d == 0 and d <= cap)
    TB = int(batch_tile)
    assert B % TB == 0
    grid = (B // TB,)

    kernel = functools.partial(_multi_bias_conv_kernel,
                               kw_size=KW, width=W, n_bias=n_bias)

    # Tiles here are KB-scale, so the default scoped-VMEM limit is ample; for very
    # large H*W raise vmem_limit_bytes via pltpu.CompilerParams (<= ~48 MiB on v7x).
    out_flat = pl.pallas_call(
        kernel,
        out_shape=jax.ShapeDtypeStruct((B, Cout, Lo), x.dtype),
        grid_spec=pltpu.PrefetchScalarGridSpec(
            num_scalar_prefetch=0,
            grid=grid,
            in_specs=[
                pl.BlockSpec((TB, Cin, Lp), lambda i: (i, 0, 0)),
                pl.BlockSpec((KH * KW, c_mid, Cin), lambda i: (0, 0, 0)),
                pl.BlockSpec((Cout, 1), lambda i: (0, 0)),
            ],
            out_specs=pl.BlockSpec((TB, Cout, Lo), lambda i: (i, 0, 0)),
        ),
        compiler_params=pltpu.CompilerParams(
            dimension_semantics=("parallel",)),
    )(x_flat, w_taps, bias_col)

    # Drop wrap-around columns and restore (B, Cout, Ho, Wo).
    return out_flat.reshape(B, Cout, Ho, W)[..., :Wo]


def multi_bias_conv_ref(x, weight, bias, *, stride=1, pad=0):
    """Pure-JAX reference mirroring the PyTorch forward."""
    y = jax.lax.conv_general_dilated(
        x, weight,
        window_strides=(stride, stride),
        padding=[(pad, pad), (pad, pad)],
        dimension_numbers=("NCHW", "OIHW", "NCHW"),
        precision=jax.lax.Precision.HIGHEST)
    return jnp.concatenate([y + b for b in bias], axis=1)


if __name__ == "__main__":
    key = jax.random.PRNGKey(0)
    B, Cin, H, W = 2, 4, 16, 16
    out_channels, n_bias = 8, 2
    KH = KW = 3
    Cmid = out_channels // n_bias

    kx, kw_key, kb_key = jax.random.split(key, 3)
    x = jax.random.normal(kx, (B, Cin, H, W), dtype=jnp.float32)

    # Conv weight ~ xavier_normal_, bias ~ normal_ (deterministic JAX equivalents).
    fan_in = Cin * KH * KW
    fan_out = Cmid * KH * KW
    std = math.sqrt(2.0 / (fan_in + fan_out))
    weight = std * jax.random.normal(kw_key, (Cmid, Cin, KH, KW), dtype=jnp.float32)
    bias = jax.random.normal(kb_key, (n_bias,), dtype=jnp.float32)

    out = multi_bias_conv(x, weight, bias)
    jax.block_until_ready(out)

    ref = multi_bias_conv_ref(x, weight, bias)
    assert out.shape == (B, out_channels, H - KH + 1, W - KW + 1)
    assert jnp.allclose(out, ref, atol=1e-4, rtol=1e-4), "mismatch vs reference"
    print("KERNEL_OK")
</pallas_src>

<mosaic_0001>
module attributes {stable_mosaic.version = 11 : i64} {
  func.func @_multi_bias_conv_kernel(%arg0: i32, %arg1: memref<1x4x258xf32, #tpu.memory_space<vmem>>, %arg2: memref<9x4x4xf32, #tpu.memory_space<vmem>>, %arg3: memref<8x1xf32, #tpu.memory_space<vmem>>, %arg4: memref<1x8x224xf32, #tpu.memory_space<vmem>>) attributes {dimension_semantics = [#tpu.dimension_semantics<parallel>], iteration_bounds = array<i64: 2>, scalar_prefetch = 0 : i64, scratch_operands = 0 : i64, tpu.core_type = #tpu.core_type<tc>, window_params = [{transform_indices = @transform_0, window_bounds = array<i64: 1, 4, 258>}, {pipeline_mode = #tpu.pipeline_mode<synchronous>, transform_indices = @transform_1, window_bounds = array<i64: 9, 4, 4>}, {pipeline_mode = #tpu.pipeline_mode<synchronous>, transform_indices = @transform_2, window_bounds = array<i64: 8, 1>}, {transform_indices = @transform_3, window_bounds = array<i64: 1, 8, 224>}]} {
    %c0 = arith.constant 0 : index
    %c0_0 = arith.constant 0 : index
    %0 = vector.load %arg3[%c0, %c0_0] : memref<8x1xf32, #tpu.memory_space<vmem>>, vector<8x1xf32>
    %cst = arith.constant 0.000000e+00 : f32
    %1 = vector.broadcast %cst : f32 to vector<4x224xf32>
    %c0_1 = arith.constant 0 : index
    %c0_2 = arith.constant 0 : index
    %c0_3 = arith.constant 0 : index
    %2 = vector.load %arg1[%c0_1, %c0_2, %c0_3] : memref<1x4x258xf32, #tpu.memory_space<vmem>>, vector<1x4x224xf32>
    %3 = vector.shape_cast %2 : vector<1x4x224xf32> to vector<4x224xf32>
    %c0_4 = arith.constant 0 : index
    %c0_5 = arith.constant 0 : index
    %c0_6 = arith.constant 0 : index
    %4 = vector.load %arg2[%c0_4, %c0_5, %c0_6] : memref<9x4x4xf32, #tpu.memory_space<vmem>>, vector<1x4x4xf32>
    %5 = vector.shape_cast %4 : vector<1x4x4xf32> to vector<4x4xf32>
    %cst_7 = arith.constant dense<0.000000e+00> : vector<4x224xf32>
    %6 = tpu.matmul %5, %3, %cst_7 {dimension_numbers = #tpu.dot_dimension_numbers<[1], [0], [0], [1], [0, 0, 1, 1], [], []>, precision = #tpu.contract_precision<fp32>} : vector<4x4xf32>, vector<4x224xf32>, vector<4x224xf32> -> vector<4x224xf32>
    %7 = arith.addf %1, %6 : vector<4x224xf32>
    %c0_8 = arith.constant 0 : index
    %c0_9 = arith.constant 0 : index
    %c1 = arith.constant 1 : index
    %8 = vector.load %arg1[%c0_8, %c0_9, %c1] : memref<1x4x258xf32, #tpu.memory_space<vmem>>, vector<1x4x224xf32>
    %9 = vector.shape_cast %8 : vector<1x4x224xf32> to vector<4x224xf32>
    %c1_10 = arith.constant 1 : index
    %c0_11 = arith.constant 0 : index
    %c0_12 = arith.constant 0 : index
    %10 = vector.load %arg2[%c1_10, %c0_11, %c0_12] : memref<9x4x4xf32, #tpu.memory_space<vmem>>, vector<1x4x4xf32>
    %11 = vector.shape_cast %10 : vector<1x4x4xf32> to vector<4x4xf32>
    %cst_13 = arith.constant dense<0.000000e+00> : vector<4x224xf32>
    %12 = tpu.matmul %11, %9, %cst_13 {dimension_numbers = #tpu.dot_dimension_numbers<[1], [0], [0], [1], [0, 0, 1, 1], [], []>, precision = #tpu.contract_precision<fp32>} : vector<4x4xf32>, vector<4x224xf32>, vector<4x224xf32> -> vector<4x224xf32>
    %13 = arith.addf %7, %12 : vector<4x224xf32>
    %c0_14 = arith.constant 0 : index
    %c0_15 = arith.constant 0 : index
    %c2 = arith.constant 2 : index
    %14 = vector.load %arg1[%c0_14, %c0_15, %c2] : memref<1x4x258xf32, #tpu.memory_space<vmem>>, vector<1x4x224xf32>
    %15 = vector.shape_cast %14 : vector<1x4x224xf32> to vector<4x224xf32>
    %c2_16 = arith.constant 2 : index
    %c0_17 = arith.constant 0 : index
    %c0_18 = arith.constant 0 : index
    %16 = vector.load %arg2[%c2_16, %c0_17, %c0_18] : memref<9x4x4xf32, #tpu.memory_space<vmem>>, vector<1x4x4xf32>
    %17 = vector.shape_cast %16 : vector<1x4x4xf32> to vector<4x4xf32>
    %cst_19 = arith.constant dense<0.000000e+00> : vector<4x224xf32>
    %18 = tpu.matmul %17, %15, %cst_19 {dimension_numbers = #tpu.dot_dimension_numbers<[1], [0], [0], [1], [0, 0, 1, 1], [], []>, precision = #tpu.contract_precision<fp32>} : vector<4x4xf32>, vector<4x224xf32>, vector<4x224xf32> -> vector<4x224xf32>
    %19 = arith.addf %13, %18 : vector<4x224xf32>
    %c0_20 = arith.constant 0 : index
    %c0_21 = arith.constant 0 : index
    %c16 = arith.constant 16 : index
    %20 = vector.load %arg1[%c0_20, %c0_21, %c16] : memref<1x4x258xf32, #tpu.memory_space<vmem>>, vector<1x4x224xf32>
    %21 = vector.shape_cast %20 : vector<1x4x224xf32> to vector<4x224xf32>
    %c3 = arith.constant 3 : index
    %c0_22 = arith.constant 0 : index
    %c0_23 = arith.constant 0 : index
    %22 = vector.load %arg2[%c3, %c0_22, %c0_23] : memref<9x4x4xf32, #tpu.memory_space<vmem>>, vector<1x4x4xf32>
    %23 = vector.shape_cast %22 : vector<1x4x4xf32> to vector<4x4xf32>
    %cst_24 = arith.constant dense<0.000000e+00> : vector<4x224xf32>
    %24 = tpu.matmul %23, %21, %cst_24 {dimension_numbers = #tpu.dot_dimension_numbers<[1], [0], [0], [1], [0, 0, 1, 1], [], []>, precision = #tpu.contract_precision<fp32>} : vector<4x4xf32>, vector<4x224xf32>, vector<4x224xf32> -> vector<4x224xf32>
    %25 = arith.addf %19, %24 : vector<4x224xf32>
    %c0_25 = arith.constant 0 : index
    %c0_26 = arith.constant 0 : index
    %c17 = arith.constant 17 : index
    %26 = vector.load %arg1[%c0_25, %c0_26, %c17] : memref<1x4x258xf32, #tpu.memory_space<vmem>>, vector<1x4x224xf32>
    %27 = vector.shape_cast %26 : vector<1x4x224xf32> to vector<4x224xf32>
    %c4 = arith.constant 4 : index
    %c0_27 = arith.constant 0 : index
    %c0_28 = arith.constant 0 : index
    %28 = vector.load %arg2[%c4, %c0_27, %c0_28] : memref<9x4x4xf32, #tpu.memory_space<vmem>>, vector<1x4x4xf32>
    %29 = vector.shape_cast %28 : vector<1x4x4xf32> to vector<4x4xf32>
    %cst_29 = arith.constant dense<0.000000e+00> : vector<4x224xf32>
    %30 = tpu.matmul %29, %27, %cst_29 {dimension_numbers = #tpu.dot_dimension_numbers<[1], [0], [0], [1], [0, 0, 1, 1], [], []>, precision = #tpu.contract_precision<fp32>} : vector<4x4xf32>, vector<4x224xf32>, vector<4x224xf32> -> vector<4x224xf32>
    %31 = arith.addf %25, %30 : vector<4x224xf32>
    %c0_30 = arith.constant 0 : index
    %c0_31 = arith.constant 0 : index
    %c18 = arith.constant 18 : index
    %32 = vector.load %arg1[%c0_30, %c0_31, %c18] : memref<1x4x258xf32, #tpu.memory_space<vmem>>, vector<1x4x224xf32>
    %33 = vector.shape_cast %32 : vector<1x4x224xf32> to vector<4x224xf32>
    %c5 = arith.constant 5 : index
    %c0_32 = arith.constant 0 : index
    %c0_33 = arith.constant 0 : index
    %34 = vector.load %arg2[%c5, %c0_32, %c0_33] : memref<9x4x4xf32, #tpu.memory_space<vmem>>, vector<1x4x4xf32>
    %35 = vector.shape_cast %34 : vector<1x4x4xf32> to vector<4x4xf32>
    %cst_34 = arith.constant dense<0.000000e+00> : vector<4x224xf32>
    %36 = tpu.matmul %35, %33, %cst_34 {dimension_numbers = #tpu.dot_dimension_numbers<[1], [0], [0], [1], [0, 0, 1, 1], [], []>, precision = #tpu.contract_precision<fp32>} : vector<4x4xf32>, vector<4x224xf32>, vector<4x224xf32> -> vector<4x224xf32>
    %37 = arith.addf %31, %36 : vector<4x224xf32>
    %c0_35 = arith.constant 0 : index
    %c0_36 = arith.constant 0 : index
    %c32 = arith.constant 32 : index
    %38 = vector.load %arg1[%c0_35, %c0_36, %c32] : memref<1x4x258xf32, #tpu.memory_space<vmem>>, vector<1x4x224xf32>
    %39 = vector.shape_cast %38 : vector<1x4x224xf32> to vector<4x224xf32>
    %c6 = arith.constant 6 : index
    %c0_37 = arith.constant 0 : index
    %c0_38 = arith.constant 0 : index
    %40 = vector.load %arg2[%c6, %c0_37, %c0_38] : memref<9x4x4xf32, #tpu.memory_space<vmem>>, vector<1x4x4xf32>
    %41 = vector.shape_cast %40 : vector<1x4x4xf32> to vector<4x4xf32>
    %cst_39 = arith.constant dense<0.000000e+00> : vector<4x224xf32>
    %42 = tpu.matmul %41, %39, %cst_39 {dimension_numbers = #tpu.dot_dimension_numbers<[1], [0], [0], [1], [0, 0, 1, 1], [], []>, precision = #tpu.contract_precision<fp32>} : vector<4x4xf32>, vector<4x224xf32>, vector<4x224xf32> -> vector<4x224xf32>
    %43 = arith.addf %37, %42 : vector<4x224xf32>
    %c0_40 = arith.constant 0 : index
    %c0_41 = arith.constant 0 : index
    %c33 = arith.constant 33 : index
    %44 = vector.load %arg1[%c0_40, %c0_41, %c33] : memref<1x4x258xf32, #tpu.memory_space<vmem>>, vector<1x4x224xf32>
    %45 = vector.shape_cast %44 : vector<1x4x224xf32> to vector<4x224xf32>
    %c7 = arith.constant 7 : index
    %c0_42 = arith.constant 0 : index
    %c0_43 = arith.constant 0 : index
    %46 = vector.load %arg2[%c7, %c0_42, %c0_43] : memref<9x4x4xf32, #tpu.memory_space<vmem>>, vector<1x4x4xf32>
    %47 = vector.shape_cast %46 : vector<1x4x4xf32> to vector<4x4xf32>
    %cst_44 = arith.constant dense<0.000000e+00> : vector<4x224xf32>
    %48 = tpu.matmul %47, %45, %cst_44 {dimension_numbers = #tpu.dot_dimension_numbers<[1], [0], [0], [1], [0, 0, 1, 1], [], []>, precision = #tpu.contract_precision<fp32>} : vector<4x4xf32>, vector<4x224xf32>, vector<4x224xf32> -> vector<4x224xf32>
    %49 = arith.addf %43, %48 : vector<4x224xf32>
    %c0_45 = arith.constant 0 : index
    %c0_46 = arith.constant 0 : index
    %c34 = arith.constant 34 : index
    %50 = vector.load %arg1[%c0_45, %c0_46, %c34] : memref<1x4x258xf32, #tpu.memory_space<vmem>>, vector<1x4x224xf32>
    %51 = vector.shape_cast %50 : vector<1x4x224xf32> to vector<4x224xf32>
    %c8 = arith.constant 8 : index
    %c0_47 = arith.constant 0 : index
    %c0_48 = arith.constant 0 : index
    %52 = vector.load %arg2[%c8, %c0_47, %c0_48] : memref<9x4x4xf32, #tpu.memory_space<vmem>>, vector<1x4x4xf32>
    %53 = vector.shape_cast %52 : vector<1x4x4xf32> to vector<4x4xf32>
    %cst_49 = arith.constant dense<0.000000e+00> : vector<4x224xf32>
    %54 = tpu.matmul %53, %51, %cst_49 {dimension_numbers = #tpu.dot_dimension_numbers<[1], [0], [0], [1], [0, 0, 1, 1], [], []>, precision = #tpu.contract_precision<fp32>} : vector<4x4xf32>, vector<4x224xf32>, vector<4x224xf32> -> vector<4x224xf32>
    %55 = arith.addf %49, %54 : vector<4x224xf32>
    %56 = tpu.concatenate %55, %55 in 0 : vector<4x224xf32>, vector<4x224xf32> -> vector<8x224xf32>
    %57 = vector.broadcast %0 : vector<8x1xf32> to vector<8x224xf32>
    %58 = arith.addf %56, %57 : vector<8x224xf32>
    %c0_50 = arith.constant 0 : index
    %c0_51 = arith.constant 0 : index
    %c0_52 = arith.constant 0 : index
    %59 = vector.load %arg4[%c0_50, %c0_51, %c0_52] : memref<1x8x224xf32, #tpu.memory_space<vmem>>, vector<1x8x224xf32>
    %60 = vector.shape_cast %59 : vector<1x8x224xf32> to vector<8x224xf32>
    %61 = vector.shape_cast %58 : vector<8x224xf32> to vector<1x8x224xf32>
    tpu.vector_store %arg4[%c0_50, %c0_51, %c0_52], %61 {strides = array<i32>} : memref<1x8x224xf32, #tpu.memory_space<vmem>>, vector<1x8x224xf32>,
    return
  }
  func.func @transform_0(%arg0: i32) -> (i32, i32, i32) {
    %c0_i32 = arith.constant 0 : i32
    %c0_i32_0 = arith.constant 0 : i32
    %c0_i32_1 = arith.constant 0 : i32
    return %arg0, %c0_i32, %c0_i32_0 : i32, i32, i32
  }
  func.func @transform_1(%arg0: i32) -> (i32, i32, i32) {
    %c0_i32 = arith.constant 0 : i32
    %c0_i32_0 = arith.constant 0 : i32
    %c0_i32_1 = arith.constant 0 : i32
    %c0_i32_2 = arith.constant 0 : i32
    return %c0_i32, %c0_i32_0, %c0_i32_1 : i32, i32, i32
  }
  func.func @transform_2(%arg0: i32) -> (i32, i32) {
    %c0_i32 = arith.constant 0 : i32
    %c0_i32_0 = arith.constant 0 : i32
    %c0_i32_1 = arith.constant 0 : i32
    return %c0_i32, %c0_i32_0 : i32, i32
  }
  func.func @transform_3(%arg0: i32) -> (i32, i32, i32) {
    %c0_i32 = arith.constant 0 : i32
    %c0_i32_0 = arith.constant 0 : i32
    %c0_i32_1 = arith.constant 0 : i32
    return %arg0, %c0_i32, %c0_i32_0 : i32, i32, i32
  }
}

</mosaic_0001>

<llo_original>
// kernel: tpu_custom_call.1
$region0: #{tpu_custom_call.1}
  #allocation0 [shape = 'u32[]', space=smem, size = 0x4, offset = 0x4, fixed_abs, tag = 'smem constant byte address 0x4 - core index']
  #allocation1 [shape = 'u32[72,128]{1,0:T(1,128)}', space=vmem, size = 0x9000, scoped, tag = 'internal scratch']
  %s0 = inlined_call_operand.vmem [shape: f32[2,4,258], index: 0, kind: input, shape index: {}]
  %s1 = inlined_call_operand.vmem [shape: f32[9,4,4], index: 1, kind: input, shape index: {}]
  %s2 = inlined_call_operand.vmem [shape: f32[8,1], index: 2, kind: input, shape index: {}]
  %s3 = inlined_call_operand.hbm [shape: f32[2,8,224], index: 3, kind: output, shape index: {}]
  %s4 = sld [smem:[#allocation0]]
  $region45: #{tpu_custom_call.1} parent=0
    _
  %s6 = ssub.s32 1, %s4
  %s7 = scalar_select 0, %s6, %s4
  $region1: #{tpu_custom_call.1} parent=0
    #allocation2 [shape = 'u8[16384]{0}', space=vmem, size = 0x4000, scoped, tag = 'output window, operand 0']
    #allocation3 [shape = 's32[2]{0}', space=sflag, size = 0x8, scoped, tag = 'scoped memory for tpu_custom_call.1']
    %8 = vsyncpa [#allocation3], 0
    %s9 = scalar_lea.sflag [#allocation3], 1
    %10 = vsyncpa %s9, 0
    loop: start=0, step=1, limit=4
    $region2: #{tpu_custom_call.1} parent=1 // loop_pre_header
      _
    $region3: #{tpu_custom_call.1} parent=1 // loop_header
      %s12 = sphi 0, %s16
      %p13 = scmp.ge.s32.totalorder %s12, 4
      %s22 = sphi 0, %s24
      %s25 = sphi 0, %s22
      %s26 = sphi 0, %s25
      %s42 = sphi 0, %s26
      %s46 = sphi 0, %s46
      %s48 = sphi 0, %s46
      %s49 = sphi 0, %s48
      %s63 = sphi 0, %s49
      %s67 = sphi 0, %s67
      %s69 = sphi 0, %s67
      %s70 = sphi 0, %s69
      %s84 = sphi 0, %s70
      %s90 = sphi 0, %s92
      %s93 = sphi 0, %s90
      %s94 = sphi 0, %s93
      %s110 = sphi 0, %s94
    $region4: #{tpu_custom_call.1} parent=1 // loop_header_branch
      %15 = sbr.rel (%p13) target = $region8
    $region5: #{tpu_custom_call.1} parent=1 // loop_body
      %s17 = ssub.s32 %s12, 1
      %s18 = ssub.s32 %s12, 2
      %s19 = sadd.s32 %s12, 1
      %s20 = ssub.s32 %s12, %s19
      %p21 = scmp.eq.s32.totalorder %s20, 0
      %s23 = sadd.s32 %s22, 1
      %s24 = scalar_select %p21, %s22, %s23
      %p27 = pneg %p21
      %p28 = scmp.eq.s32.totalorder %s12, 1
      %p29 = por %p27, %p28
      %p30 = scmp.ne.s32.totalorder %s22, %s25
      %p31 = scmp.eq.s32.totalorder %s12, 0
      %p32 = por %p30, %p31
      %p33 = scmp.ne.s32.totalorder %s22, %s25
      %p34 = scmp.eq.s32.totalorder %s17, 1
      %p35 = por %p33, %p34
      %p36 = scmp.ne.s32.totalorder %s25, %s26
      %p37 = scmp.eq.s32.totalorder %s17, 0
      %p38 = por %p36, %p37
      %p39 = scmp.ne.s32.totalorder %s25, %s26
      %p40 = scmp.eq.s32.totalorder %s18, 1
      %p41 = por %p39, %p40
      %p43 = scmp.ne.s32.totalorder %s26, %s42
      %p44 = scmp.eq.s32.totalorder %s18, 0
      %p45 = por %p43, %p44
      %s47 = sadd.s32 %s46, 1
      %p50 = scmp.eq.s32.totalorder %s12, 1
      %p51 = scmp.ne.s32.totalorder %s46, %s48
      %p52 = scmp.eq.s32.totalorder %s12, 0
      %p53 = por %p51, %p52
      %p54 = scmp.ne.s32.totalorder %s46, %s48
      %p55 = scmp.eq.s32.totalorder %s17, 1
      %p56 = por %p54, %p55
      %p57 = scmp.ne.s32.totalorder %s48, %s49
      %p58 = scmp.eq.s32.totalorder %s17, 0
      %p59 = por %p57, %p58
      %p60 = scmp.ne.s32.totalorder %s48, %s49
      %p61 = scmp.eq.s32.totalorder %s18, 1
      %p62 = por %p60, %p61
      %p64 = scmp.ne.s32.totalorder %s49, %s63
      %p65 = scmp.eq.s32.totalorder %s18, 0
      %p66 = por %p64, %p65
      %s68 = sadd.s32 %s67, 1
      %p71 = scmp.eq.s32.totalorder %s12, 1
      %p72 = scmp.ne.s32.totalorder %s67, %s69
      %p73 = scmp.eq.s32.totalorder %s12, 0
      %p74 = por %p72, %p73
      %p75 = scmp.ne.s32.totalorder %s67, %s69
      %p76 = scmp.eq.s32.totalorder %s17, 1
      %p77 = por %p75, %p76
      %p78 = scmp.ne.s32.totalorder %s69, %s70
      %p79 = scmp.eq.s32.totalorder %s17, 0
      %p80 = por %p78, %p79
      %p81 = scmp.ne.s32.totalorder %s69, %s70
      %p82 = scmp.eq.s32.totalorder %s18, 1
      %p83 = por %p81, %p82
      %p85 = scmp.ne.s32.totalorder %s70, %s84
      %p86 = scmp.eq.s32.totalorder %s18, 0
      %p87 = por %p85, %p86
      %s88 = ssub.s32 %s12, %s19
      %p89 = scmp.eq.s32.totalorder %s88, 0
      %s91 = sadd.s32 %s90, 1
      %s92 = scalar_select %p89, %s90, %s91
      %p95 = pneg %p89
      %p96 = scmp.eq.s32.totalorder %s12, 1
      %p97 = por %p95, %p96
      %p98 = scmp.ne.s32.totalorder %s90, %s93
      %p99 = scmp.eq.s32.totalorder %s12, 0
      %p100 = por %p98, %p99
      %p101 = scmp.ne.s32.totalorder %s90, %s93
      %p102 = scmp.eq.s32.totalorder %s17, 1
      %p103 = por %p101, %p102
      %p104 = scmp.ne.s32.totalorder %s93, %s94
      %p105 = scmp.eq.s32.totalorder %s17, 0
      %p106 = por %p104, %p105
      %p107 = scmp.ne.s32.totalorder %s93, %s94
      %p108 = scmp.eq.s32.totalorder %s18, 1
      %p109 = por %p107, %p108
      %p111 = scmp.ne.s32.totalorder %s94, %s110
      %p112 = scmp.eq.s32.totalorder %s18, 0
      %p113 = por %p111, %p112
      %p114 = scmp.le.s32.totalorder 1, %s12
      %p115 = scmp.lt.s32.totalorder %s12, 3
      %p116 = pnand %p114, %p115
      %p117 = pneg %p116
      // Predicated region
      $region9: #{tpu_custom_call.1} parent=5 // pred_check
        _
      $region10: #{tpu_custom_call.1} parent=5 // pred_check_branch
        %119 = sbr.rel (%p116) target = $region12
      $region11: #{tpu_custom_call.1} parent=5 // pred_region
        %s120 = ssub.s32 %s12, 1
        // Predicated region
        $region13: #{tpu_custom_call.1} parent=11 // pred_check
          %p121 = pneg %p59
        $region14: #{tpu_custom_call.1} parent=11 // pred_check_branch
          %123 = sbr.rel (%p121) target = $region16
        $region15: #{tpu_custom_call.1} parent=11 // pred_region
          _
        $region16: #{tpu_custom_call.1} parent=11 // pred_fallthru
          _
        // Predicated region
        $region17: #{tpu_custom_call.1} parent=11 // pred_check
          %p124 = pneg %p80
        $region18: #{tpu_custom_call.1} parent=11 // pred_check_branch
          %126 = sbr.rel (%p124) target = $region20
        $region19: #{tpu_custom_call.1} parent=11 // pred_region
          _
        $region20: #{tpu_custom_call.1} parent=11 // pred_fallthru
          _
      $region12: #{tpu_custom_call.1} parent=5 // pred_fallthru
        _
      %p127 = scmp.lt.s32.totalorder %s12, 2
      // Predicated region
      $region21: #{tpu_custom_call.1} parent=5 // pred_check
        %p128 = pneg %p127
      $region22: #{tpu_custom_call.1} parent=5 // pred_check_branch
        %130 = sbr.rel (%p128) target = $region24
      $region23: #{tpu_custom_call.1} parent=5 // pred_region
        // Predicated region
        $region25: #{tpu_custom_call.1} parent=23 // pred_check
          %p131 = pneg %p32
        $region26: #{tpu_custom_call.1} parent=23 // pred_check_branch
          %133 = sbr.rel (%p131) target = $region28
        $region27: #{tpu_custom_call.1} parent=23 // pred_region
          %p134 = scmp.lt.s32.totalorder %s12, 1
          %s135 = scalar_select %p134, %s12, 1
          %s136 = smul.addr %s135, 3
          %s137 = smul.addr %s136, 4
          %s138 = scalar_lea.vmem %s0, %s137
        $region28: #{tpu_custom_call.1} parent=23 // pred_fallthru
          _
      $region24: #{tpu_custom_call.1} parent=5 // pred_fallthru
        _
      %p139 = scmp.le.s32.totalorder 1, %s12
      %p140 = scmp.lt.s32.totalorder %s12, 3
      %p141 = pnand %p139, %p140
      %p142 = pneg %p141
      // Predicated region
      $region29: #{tpu_custom_call.1} parent=5 // pred_check
        _
      $region30: #{tpu_custom_call.1} parent=5 // pred_check_branch
        %144 = sbr.rel (%p141) target = $region32
      $region31: #{tpu_custom_call.1} parent=5 // pred_region
        %s145 = ssub.s32 %s12, 1
        %p146 = scmp.lt.s32.totalorder %s17, 1
        %s147 = scalar_select %p146, %s17, 1
        %s148 = smul.addr %s147, 3
        %s149 = smul.addr %s148, 4
        %s150 = scalar_lea.vmem %s0, %s149
        %p151 = pneg %p38
        %p152 = pneg %p35
        %p153 = pneg %p59
        %p154 = pneg %p56
        %p155 = pneg %p80
        %p156 = pneg %p77
        %p157 = pneg %p106
        %p158 = pneg %p103
        %s159 = sand.u32 %s93, 1
        %s160 = scalar_lea.sflag [#allocation3], %s159
        %s161 = sand.u32 %s93, 1
        %s162 = smul.addr %s161, 16
        %s163 = scalar_lea.vmem [#allocation2], %s162
        %p164 = scmp.lt.s32.totalorder %s17, 1
        %s165 = scalar_select %p164, %s17, 1
        %s166 = smul.addr %s165, 3
        %s167 = smul.addr %s166, 4
        %s168 = scalar_lea.vmem %s0, %s167
        %v169 = vld [vmem:[%s2] sm:$0xff]
        %v170 = vld [vmem:[%s168] sm:$0xff]
        %v171 = vld [vmem:[%s1] sm:$0xf]
        %s172 = scalar_lea.vmem %s1, 4
        %v173 = vld [vmem:[%s172] sm:$0xf]
        %175 = vst [vmem:[#allocation1] ss:$2 sm:$0xff] %v170
        %v176 = vld.sshfl [vmem:[#allocation1] sm:$0xff pattern:$0x75316420]
        %v177 = vld.sshfl [vmem:[#allocation1 + $0x8] sm:$0xff pattern:$0x75316420]
        %178 = vrot.lane.b32.xlu0 %v176, 127
        %v179 = vpop.permute.xlu0 %178
        %180 = vrot.lane.b32.xlu0 %v177, 127
        %v181 = vpop.permute.xlu0 %180
        %vm182 = vcmask 1039360
        %v183 = vsel %vm182, %v179, %v181
        %vm184 = vcmask 31744
        %v186 = vsel %vm184, %v173, 0
        %vm188 = vcmask 1043456
        %v189 = vsel %vm188, %v183, 0
        %v191 = vsel %vm188, %v181, 0
        %193 = vmatpush.msra.mxu0 0.0
        %194 = vmatpush.msra.mxu0 0.0
        %195 = vmatpush.msra.mxu0 0.0
        %196 = vmatpush.msra.mxu0 0.0
        %197 = vmatpush.msra.mxu0 0.0
        %198 = vmatpush.msra.mxu0 0.0
        %199 = vmatpush.msra.mxu0 0.0
        %200 = vmatpush.msra.mxu0 0.0
        %201 = vmatpush.msra.mxu0 0.0
        %202 = vmatpush.msra.mxu0 0.0
        %203 = vmatpush.msra.mxu0 0.0
        %204 = vmatpush.msra.mxu0 0.0
        %205 = vmatpush.msra.mxu0 0.0
        %206 = vmatpush.msra.mxu0 0.0
        %207 = vmatpush.msra.mxu0 0.0
        %v208 = vand.u32 %v189, 4294901760
        %209 = vmatpush.msra.mxu0 %v208
        %v210 = vand.u32 %v186, 4294901760
        %v211 = vsub.f32 %v186, %v210
        %v212 = vand.u32 %v211, 4294901760
        %v213 = vsub.f32 %v211, %v212
        %v214 = vand.u32 %v213, 4294901760
        %215 = vmatmul.f32.gmra.mxu0 %v214
        %v216 = vpop.f32.mrf.mxu0
        %v217 = vadd.f32 0.0, %v216
        %218 = vdwg.mxu0
        %219 = vmatpush.msra.mxu0 0.0
        %220 = vmatpush.msra.mxu0 0.0
        %221 = vmatpush.msra.mxu0 0.0
        %222 = vmatpush.msra.mxu0 0.0
        %223 = vmatpush.msra.mxu0 0.0
        %224 = vmatpush.msra.mxu0 0.0
        %225 = vmatpush.msra.mxu0 0.0
        %226 = vmatpush.msra.mxu0 0.0
        %227 = vmatpush.msra.mxu0 0.0
        %228 = vmatpush.msra.mxu0 0.0
        %229 = vmatpush.msra.mxu0 0.0
        %230 = vmatpush.msra.mxu0 0.0
        %231 = vmatpush.msra.mxu0 0.0
        %232 = vmatpush.msra.mxu0 0.0
        %233 = vmatpush.msra.mxu0 0.0
        %v234 = vand.u32 %v189, 4294901760
        %v235 = vsub.f32 %v189, %v234
        %v236 = vand.u32 %v235, 4294901760
        %v237 = vsub.f32 %v235, %v236
        %v238 = vand.u32 %v237, 4294901760
        %239 = vmatpush.msra.mxu0 %v238
        %v240 = vand.u32 %v186, 4294901760
        %241 = vmatmul.f32.gmra.mxu0 %v240
        %v242 = vpop.f32.mrf.mxu0
        %v243 = vadd.f32 %v217, %v242
        %244 = vdwg.mxu0
        %245 = vmatpush.msra.mxu0 0.0
        %246 = vmatpush.msra.mxu0 0.0
        %247 = vmatpush.msra.mxu0 0.0
        %248 = vmatpush.msra.mxu0 0.0
        %249 = vmatpush.msra.mxu0 0.0
        %250 = vmatpush.msra.mxu0 0.0
        %251 = vmatpush.msra.mxu0 0.0
        %252 = vmatpush.msra.mxu0 0.0
        %253 = vmatpush.msra.mxu0 0.0
        %254 = vmatpush.msra.mxu0 0.0
        %255 = vmatpush.msra.mxu0 0.0
        %256 = vmatpush.msra.mxu0 0.0
        %257 = vmatpush.msra.mxu0 0.0
        %258 = vmatpush.msra.mxu0 0.0
        %259 = vmatpush.msra.mxu0 0.0
        %v260 = vand.u32 %v189, 4294901760
        %v261 = vsub.f32 %v189, %v260
        %262 = vmatpush.msra.mxu0 %v261
        %v263 = vand.u32 %v186, 4294901760
        %v264 = vsub.f32 %v186, %v263
        %265 = vmatmul.f32.gmra.mxu0 %v264
        %v266 = vpop.f32.mrf.mxu0
        %v267 = vadd.f32 %v243, %v266
        %268 = vdwg.mxu0
        %269 = vmatpush.msra.mxu0 0.0
        %270 = vmatpush.msra.mxu0 0.0
        %271 = vmatpush.msra.mxu0 0.0
        %272 = vmatpush.msra.mxu0 0.0
        %273 = vmatpush.msra.mxu0 0.0
        %274 = vmatpush.msra.mxu0 0.0
        %275 = vmatpush.msra.mxu0 0.0
        %276 = vmatpush.msra.mxu0 0.0
        %277 = vmatpush.msra.mxu0 0.0
        %278 = vmatpush.msra.mxu0 0.0
        %279 = vmatpush.msra.mxu0 0.0
        %280 = vmatpush.msra.mxu0 0.0
        %281 = vmatpush.msra.mxu0 0.0
        %282 = vmatpush.msra.mxu0 0.0
        %283 = vmatpush.msra.mxu0 0.0
        %v284 = vand.u32 %v189, 4294901760
        %285 = vmatpush.msra.mxu0 %v284
        %v286 = vand.u32 %v186, 4294901760
        %v287 = vsub.f32 %v186, %v286
        %v288 = vand.u32 %v287, 4294901760
        %289 = vmatmul.f32.gmra.mxu0 %v288
        %v290 = vpop.f32.mrf.mxu0
        %v291 = vadd.f32 %v267, %v290
        %292 = vdwg.mxu0
        %293 = vmatpush.msra.mxu0 0.0
        %294 = vmatpush.msra.mxu0 0.0
        %295 = vmatpush.msra.mxu0 0.0
        %296 = vmatpush.msra.mxu0 0.0
        %297 = vmatpush.msra.mxu0 0.0
        %298 = vmatpush.msra.mxu0 0.0
        %299 = vmatpush.msra.mxu0 0.0
        %300 = vmatpush.msra.mxu0 0.0
        %301 = vmatpush.msra.mxu0 0.0
        %302 = vmatpush.msra.mxu0 0.0
        %303 = vmatpush.msra.mxu0 0.0
        %304 = vmatpush.msra.mxu0 0.0
        %305 = vmatpush.msra.mxu0 0.0
        %306 = vmatpush.msra.mxu0 0.0
        %307 = vmatpush.msra.mxu0 0.0
        %v308 = vand.u32 %v189, 4294901760
        %v309 = vsub.f32 %v189, %v308
        %v310 = vand.u32 %v309, 4294901760
        %311 = vmatpush.msra.mxu0 %v310
        %v312 = vand.u32 %v186, 4294901760
        %313 = vmatmul.f32.gmra.mxu0 %v312
        %v314 = vpop.f32.mrf.mxu0
        %v315 = vadd.f32 %v291, %v314
        %316 = vdwg.mxu0
        %317 = vmatpush.msra.mxu0 0.0
        %318 = vmatpush.msra.mxu0 0.0
        %319 = vmatpush.msra.mxu0 0.0
        %320 = vmatpush.msra.mxu0 0.0
        %321 = vmatpush.msra.mxu0 0.0
        %322 = vmatpush.msra.mxu0 0.0
        %323 = vmatpush.msra.mxu0 0.0
        %324 = vmatpush.msra.mxu0 0.0
        %325 = vmatpush.msra.mxu0 0.0
        %326 = vmatpush.msra.mxu0 0.0
        %327 = vmatpush.msra.mxu0 0.0
        %328 = vmatpush.msra.mxu0 0.0
        %329 = vmatpush.msra.mxu0 0.0
        %330 = vmatpush.msra.mxu0 0.0
        %331 = vmatpush.msra.mxu0 0.0
        %v332 = vand.u32 %v189, 4294901760
        %333 = vmatpush.msra.mxu0 %v332
        %v334 = vand.u32 %v186, 4294901760
        %335 = vmatmul.f32.gmra.mxu0 %v334
        %v336 = vpop.f32.mrf.mxu0
        %v337 = vadd.f32 %v315, %v336
        %338 = vdwg.mxu0
        %339 = vmatpush.msra.mxu0 0.0
        %340 = vmatpush.msra.mxu0 0.0
        %341 = vmatpush.msra.mxu0 0.0
        %342 = vmatpush.msra.mxu0 0.0
        %343 = vmatpush.msra.mxu0 0.0
        %344 = vmatpush.msra.mxu0 0.0
        %345 = vmatpush.msra.mxu0 0.0
        %346 = vmatpush.msra.mxu0 0.0
        %347 = vmatpush.msra.mxu0 0.0
        %348 = vmatpush.msra.mxu0 0.0
        %349 = vmatpush.msra.mxu0 0.0
        %350 = vmatpush.msra.mxu0 0.0
        %351 = vmatpush.msra.mxu0 0.0
        %352 = vmatpush.msra.mxu0 0.0
        %353 = vmatpush.msra.mxu0 0.0
        %v354 = vand.u32 %v191, 4294901760
        %355 = vmatpush.msra.mxu0 %v354
        %v356 = vand.u32 %v186, 4294901760
        %v357 = vsub.f32 %v186, %v356
        %v358 = vand.u32 %v357, 4294901760
        %v359 = vsub.f32 %v357, %v358
        %v360 = vand.u32 %v359, 4294901760
        %361 = vmatmul.f32.gmra.mxu0 %v360
        %v362 = vpop.f32.mrf.mxu0
        %v363 = vadd.f32 0.0, %v362
        %364 = vdwg.mxu0
        %365 = vmatpush.msra.mxu0 0.0
        %366 = vmatpush.msra.mxu0 0.0
        %367 = vmatpush.msra.mxu0 0.0
        %368 = vmatpush.msra.mxu0 0.0
        %369 = vmatpush.msra.mxu0 0.0
        %370 = vmatpush.msra.mxu0 0.0
        %371 = vmatpush.msra.mxu0 0.0
        %372 = vmatpush.msra.mxu0 0.0
        %373 = vmatpush.msra.mxu0 0.0
        %374 = vmatpush.msra.mxu0 0.0
        %375 = vmatpush.msra.mxu0 0.0
        %376 = vmatpush.msra.mxu0 0.0
        %377 = vmatpush.msra.mxu0 0.0
        %378 = vmatpush.msra.mxu0 0.0
        %379 = vmatpush.msra.mxu0 0.0
        %v380 = vand.u32 %v191, 4294901760
        %v381 = vsub.f32 %v191, %v380
        %v382 = vand.u32 %v381, 4294901760
        %v383 = vsub.f32 %v381, %v382
        %v384 = vand.u32 %v383, 4294901760
        %385 = vmatpush.msra.mxu0 %v384
        %v386 = vand.u32 %v186, 4294901760
        %387 = vmatmul.f32.gmra.mxu0 %v386
        %v388 = vpop.f32.mrf.mxu0
        %v389 = vadd.f32 %v363, %v388
        %390 = vdwg.mxu0
        %391 = vmatpush.msra.mxu0 0.0
        %392 = vmatpush.msra.mxu0 0.0
        %393 = vmatpush.msra.mxu0 0.0
        %394 = vmatpush.msra.mxu0 0.0
        %395 = vmatpush.msra.mxu0 0.0
        %396 = vmatpush.msra.mxu0 0.0
        %397 = vmatpush.msra.mxu0 0.0
        %398 = vmatpush.msra.mxu0 0.0
        %399 = vmatpush.msra.mxu0 0.0
        %400 = vmatpush.msra.mxu0 0.0
        %401 = vmatpush.msra.mxu0 0.0
        %402 = vmatpush.msra.mxu0 0.0
        %403 = vmatpush.msra.mxu0 0.0
        %404 = vmatpush.msra.mxu0 0.0
        %405 = vmatpush.msra.mxu0 0.0
        %v406 = vand.u32 %v191, 4294901760
        %v407 = vsub.f32 %v191, %v406
        %408 = vmatpush.msra.mxu0 %v407
        %v409 = vand.u32 %v186, 4294901760
        %v410 = vsub.f32 %v186, %v409
        %411 = vmatmul.f32.gmra.mxu0 %v410
        %v412 = vpop.f32.mrf.mxu0
        %v413 = vadd.f32 %v389, %v412
        %414 = vdwg.mxu0
        %415 = vmatpush.msra.mxu0 0.0
        %416 = vmatpush.msra.mxu0 0.0
        %417 = vmatpush.msra.mxu0 0.0
        %418 = vmatpush.msra.mxu0 0.0
        %419 = vmatpush.msra.mxu0 0.0
        %420 = vmatpush.msra.mxu0 0.0
        %421 = vmatpush.msra.mxu0 0.0
        %422 = vmatpush.msra.mxu0 0.0
        %423 = vmatpush.msra.mxu0 0.0
        %424 = vmatpush.msra.mxu0 0.0
        %425 = vmatpush.msra.mxu0 0.0
        %426 = vmatpush.msra.mxu0 0.0
        %427 = vmatpush.msra.mxu0 0.0
        %428 = vmatpush.msra.mxu0 0.0
        %429 = vmatpush.msra.mxu0 0.0
        %v430 = vand.u32 %v191, 4294901760
        %431 = vmatpush.msra.mxu0 %v430
        %v432 = vand.u32 %v186, 4294901760
        %v433 = vsub.f32 %v186, %v432
        %v434 = vand.u32 %v433, 4294901760
        %435 = vmatmul.f32.gmra.mxu0 %v434
        %v436 = vpop.f32.mrf.mxu0
        %v437 = vadd.f32 %v413, %v436
        %438 = vdwg.mxu0
        %439 = vmatpush.msra.mxu0 0.0
        %440 = vmatpush.msra.mxu0 0.0
        %441 = vmatpush.msra.mxu0 0.0
        %442 = vmatpush.msra.mxu0 0.0
        %443 = vmatpush.msra.mxu0 0.0
        %444 = vmatpush.msra.mxu0 0.0
        %445 = vmatpush.msra.mxu0 0.0
        %446 = vmatpush.msra.mxu0 0.0
        %447 = vmatpush.msra.mxu0 0.0
        %448 = vmatpush.msra.mxu0 0.0
        %449 = vmatpush.msra.mxu0 0.0
        %450 = vmatpush.msra.mxu0 0.0
        %451 = vmatpush.msra.mxu0 0.0
        %452 = vmatpush.msra.mxu0 0.0
        %453 = vmatpush.msra.mxu0 0.0
        %v454 = vand.u32 %v191, 4294901760
        %v455 = vsub.f32 %v191, %v454
        %v456 = vand.u32 %v455, 4294901760
        %457 = vmatpush.msra.mxu0 %v456
        %v458 = vand.u32 %v186, 4294901760
        %459 = vmatmul.f32.gmra.mxu0 %v458
        %v460 = vpop.f32.mrf.mxu0
        %v461 = vadd.f32 %v437, %v460
        %462 = vdwg.mxu0
        %463 = vmatpush.msra.mxu0 0.0
        %464 = vmatpush.msra.mxu0 0.0
        %465 = vmatpush.msra.mxu0 0.0
        %466 = vmatpush.msra.mxu0 0.0
        %467 = vmatpush.msra.mxu0 0.0
        %468 = vmatpush.msra.mxu0 0.0
        %469 = vmatpush.msra.mxu0 0.0
        %470 = vmatpush.msra.mxu0 0.0
        %471 = vmatpush.msra.mxu0 0.0
        %472 = vmatpush.msra.mxu0 0.0
        %473 = vmatpush.msra.mxu0 0.0
        %474 = vmatpush.msra.mxu0 0.0
        %475 = vmatpush.msra.mxu0 0.0
        %476 = vmatpush.msra.mxu0 0.0
        %477 = vmatpush.msra.mxu0 0.0
        %v478 = vand.u32 %v191, 4294901760
        %479 = vmatpush.msra.mxu0 %v478
        %v480 = vand.u32 %v186, 4294901760
        %481 = vmatmul.f32.gmra.mxu0 %v480
        %v482 = vpop.f32.mrf.mxu0
        %v483 = vadd.f32 %v461, %v482
        %484 = vdwg.mxu0
        %485 = vst [vmem:[#allocation1] ss:$2 sm:$0xff] %v170
        %v486 = vld.sshfl [vmem:[#allocation1] sm:$0xff pattern:$0x75316420]
        %v487 = vld.sshfl [vmem:[#allocation1 + $0x8] sm:$0xff pattern:$0x75316420]
        %v489 = vsel %vm184, %v171, 0
        %v491 = vsel %vm188, %v486, 0
        %v493 = vsel %vm188, %v487, 0
        %495 = vmatpush.msra.mxu0 0.0
        %496 = vmatpush.msra.mxu0 0.0
        %497 = vmatpush.msra.mxu0 0.0
        %498 = vmatpush.msra.mxu0 0.0
        %499 = vmatpush.msra.mxu0 0.0
        %500 = vmatpush.msra.mxu0 0.0
        %501 = vmatpush.msra.mxu0 0.0
        %502 = vmatpush.msra.mxu0 0.0
        %503 = vmatpush.msra.mxu0 0.0
        %504 = vmatpush.msra.mxu0 0.0
        %505 = vmatpush.msra.mxu0 0.0
        %506 = vmatpush.msra.mxu0 0.0
        %507 = vmatpush.msra.mxu0 0.0
        %508 = vmatpush.msra.mxu0 0.0
        %509 = vmatpush.msra.mxu0 0.0
        %v510 = vand.u32 %v491, 4294901760
        %511 = vmatpush.msra.mxu0 %v510
        %v512 = vand.u32 %v489, 4294901760
        %v513 = vsub.f32 %v489, %v512
        %v514 = vand.u32 %v513, 4294901760
        %v515 = vsub.f32 %v513, %v514
        %v516 = vand.u32 %v515, 4294901760
        %517 = vmatmul.f32.gmra.mxu0 %v516
        %v518 = vpop.f32.mrf.mxu0
        %v519 = vadd.f32 %v337, %v518
        %520 = vdwg.mxu0
        %521 = vmatpush.msra.mxu0 0.0
        %522 = vmatpush.msra.mxu0 0.0
        %523 = vmatpush.msra.mxu0 0.0
        %524 = vmatpush.msra.mxu0 0.0
        %525 = vmatpush.msra.mxu0 0.0
        %526 = vmatpush.msra.mxu0 0.0
        %527 = vmatpush.msra.mxu0 0.0
        %528 = vmatpush.msra.mxu0 0.0
        %529 = vmatpush.msra.mxu0 0.0
        %530 = vmatpush.msra.mxu0 0.0
        %531 = vmatpush.msra.mxu0 0.0
        %532 = vmatpush.msra.mxu0 0.0
        %533 = vmatpush.msra.mxu0 0.0
        %534 = vmatpush.msra.mxu0 0.0
        %535 = vmatpush.msra.mxu0 0.0
        %v536 = vand.u32 %v491, 4294901760
        %v537 = vsub.f32 %v491, %v536
        %v538 = vand.u32 %v537, 4294901760
        %v539 = vsub.f32 %v537, %v538
        %v540 = vand.u32 %v539, 4294901760
        %541 = vmatpush.msra.mxu0 %v540
        %v542 = vand.u32 %v489, 4294901760
        %543 = vmatmul.f32.gmra.mxu0 %v542
        %v544 = vpop.f32.mrf.mxu0
        %v545 = vadd.f32 %v519, %v544
        %546 = vdwg.mxu0
        %547 = vmatpush.msra.mxu0 0.0
        %548 = vmatpush.msra.mxu0 0.0
        %549 = vmatpush.msra.mxu0 0.0
        %550 = vmatpush.msra.mxu0 0.0
        %551 = vmatpush.msra.mxu0 0.0
        %552 = vmatpush.msra.mxu0 0.0
        %553 = vmatpush.msra.mxu0 0.0
        %554 = vmatpush.msra.mxu0 0.0
        %555 = vmatpush.msra.mxu0 0.0
        %556 = vmatpush.msra.mxu0 0.0
        %557 = vmatpush.msra.mxu0 0.0
        %558 = vmatpush.msra.mxu0 0.0
        %559 = vmatpush.msra.mxu0 0.0
        %560 = vmatpush.msra.mxu0 0.0
        %561 = vmatpush.msra.mxu0 0.0
        %v562 = vand.u32 %v491, 4294901760
        %v563 = vsub.f32 %v491, %v562
        %564 = vmatpush.msra.mxu0 %v563
        %v565 = vand.u32 %v489, 4294901760
        %v566 = vsub.f32 %v489, %v565
        %567 = vmatmul.f32.gmra.mxu0 %v566
        %v568 = vpop.f32.mrf.mxu0
        %v569 = vadd.f32 %v545, %v568
        %570 = vdwg.mxu0
        %571 = vmatpush.msra.mxu0 0.0
        %572 = vmatpush.msra.mxu0 0.0
        %573 = vmatpush.msra.mxu0 0.0
        %574 = vmatpush.msra.mxu0 0.0
        %575 = vmatpush.msra.mxu0 0.0
        %576 = vmatpush.msra.mxu0 0.0
        %577 = vmatpush.msra.mxu0 0.0
        %578 = vmatpush.msra.mxu0 0.0
        %579 = vmatpush.msra.mxu0 0.0
        %580 = vmatpush.msra.mxu0 0.0
        %581 = vmatpush.msra.mxu0 0.0
        %582 = vmatpush.msra.mxu0 0.0
        %583 = vmatpush.msra.mxu0 0.0
        %584 = vmatpush.msra.mxu0 0.0
        %585 = vmatpush.msra.mxu0 0.0
        %v586 = vand.u32 %v491, 4294901760
        %587 = vmatpush.msra.mxu0 %v586
        %v588 = vand.u32 %v489, 4294901760
        %v589 = vsub.f32 %v489, %v588
        %v590 = vand.u32 %v589, 4294901760
        %591 = vmatmul.f32.gmra.mxu0 %v590
        %v592 = vpop.f32.mrf.mxu0
        %v593 = vadd.f32 %v569, %v592
        %594 = vdwg.mxu0
        %595 = vmatpush.msra.mxu0 0.0
        %596 = vmatpush.msra.mxu0 0.0
        %597 = vmatpush.msra.mxu0 0.0
        %598 = vmatpush.msra.mxu0 0.0
        %599 = vmatpush.msra.mxu0 0.0
        %600 = vmatpush.msra.mxu0 0.0
        %601 = vmatpush.msra.mxu0 0.0
        %602 = vmatpush.msra.mxu0 0.0
        %603 = vmatpush.msra.mxu0 0.0
        %604 = vmatpush.msra.mxu0 0.0
        %605 = vmatpush.msra.mxu0 0.0
        %606 = vmatpush.msra.mxu0 0.0
        %607 = vmatpush.msra.mxu0 0.0
        %608 = vmatpush.msra.mxu0 0.0
        %609 = vmatpush.msra.mxu0 0.0
        %v610 = vand.u32 %v491, 4294901760
        %v611 = vsub.f32 %v491, %v610
        %v612 = vand.u32 %v611, 4294901760
        %613 = vmatpush.msra.mxu0 %v612
        %v614 = vand.u32 %v489, 4294901760
        %615 = vmatmul.f32.gmra.mxu0 %v614
        %v616 = vpop.f32.mrf.mxu0
        %v617 = vadd.f32 %v593, %v616
        %618 = vdwg.mxu0
        %619 = vmatpush.msra.mxu0 0.0
        %620 = vmatpush.msra.mxu0 0.0
        %621 = vmatpush.msra.mxu0 0.0
        %622 = vmatpush.msra.mxu0 0.0
        %623 = vmatpush.msra.mxu0 0.0
        %624 = vmatpush.msra.mxu0 0.0
        %625 = vmatpush.msra.mxu0 0.0
        %626 = vmatpush.msra.mxu0 0.0
        %627 = vmatpush.msra.mxu0 0.0
        %628 = vmatpush.msra.mxu0 0.0
        %629 = vmatpush.msra.mxu0 0.0
        %630 = vmatpush.msra.mxu0 0.0
        %631 = vmatpush.msra.mxu0 0.0
        %632 = vmatpush.msra.mxu0 0.0
        %633 = vmatpush.msra.mxu0 0.0
        %v634 = vand.u32 %v491, 4294901760
        %635 = vmatpush.msra.mxu0 %v634
        %v636 = vand.u32 %v489, 4294901760
        %637 = vmatmul.f32.gmra.mxu0 %v636
        %v638 = vpop.f32.mrf.mxu0
        %v639 = vadd.f32 %v617, %v638
        %640 = vdwg.mxu0
        %641 = vmatpush.msra.mxu0 0.0
        %642 = vmatpush.msra.mxu0 0.0
        %643 = vmatpush.msra.mxu0 0.0
        %644 = vmatpush.msra.mxu0 0.0
        %645 = vmatpush.msra.mxu0 0.0
        %646 = vmatpush.msra.mxu0 0.0
        %647 = vmatpush.msra.mxu0 0.0
        %648 = vmatpush.msra.mxu0 0.0
        %649 = vmatpush.msra.mxu0 0.0
        %650 = vmatpush.msra.mxu0 0.0
        %651 = vmatpush.msra.mxu0 0.0
        %652 = vmatpush.msra.mxu0 0.0
        %653 = vmatpush.msra.mxu0 0.0
        %654 = vmatpush.msra.mxu0 0.0
        %655 = vmatpush.msra.mxu0 0.0
        %v656 = vand.u32 %v493, 4294901760
        %657 = vmatpush.msra.mxu0 %v656
        %v658 = vand.u32 %v489, 4294901760
        %v659 = vsub.f32 %v489, %v658
        %v660 = vand.u32 %v659, 4294901760
        %v661 = vsub.f32 %v659, %v660
        %v662 = vand.u32 %v661, 4294901760
        %663 = vmatmul.f32.gmra.mxu0 %v662
        %v664 = vpop.f32.mrf.mxu0
        %v665 = vadd.f32 %v483, %v664
        %666 = vdwg.mxu0
        %667 = vmatpush.msra.mxu0 0.0
        %668 = vmatpush.msra.mxu0 0.0
        %669 = vmatpush.msra.mxu0 0.0
        %670 = vmatpush.msra.mxu0 0.0
        %671 = vmatpush.msra.mxu0 0.0
        %672 = vmatpush.msra.mxu0 0.0
        %673 = vmatpush.msra.mxu0 0.0
        %674 = vmatpush.msra.mxu0 0.0
        %675 = vmatpush.msra.mxu0 0.0
        %676 = vmatpush.msra.mxu0 0.0
        %677 = vmatpush.msra.mxu0 0.0
        %678 = vmatpush.msra.mxu0 0.0
        %679 = vmatpush.msra.mxu0 0.0
        %680 = vmatpush.msra.mxu0 0.0
        %681 = vmatpush.msra.mxu0 0.0
        %v682 = vand.u32 %v493, 4294901760
        %v683 = vsub.f32 %v493, %v682
        %v684 = vand.u32 %v683, 4294901760
        %v685 = vsub.f32 %v683, %v684
        %v686 = vand.u32 %v685, 4294901760
        %687 = vmatpush.msra.mxu0 %v686
        %v688 = vand.u32 %v489, 4294901760
        %689 = vmatmul.f32.gmra.mxu0 %v688
        %v690 = vpop.f32.mrf.mxu0
        %v691 = vadd.f32 %v665, %v690
        %692 = vdwg.mxu0
        %693 = vmatpush.msra.mxu0 0.0
        %694 = vmatpush.msra.mxu0 0.0
        %695 = vmatpush.msra.mxu0 0.0
        %696 = vmatpush.msra.mxu0 0.0
        %697 = vmatpush.msra.mxu0 0.0
        %698 = vmatpush.msra.mxu0 0.0
        %699 = vmatpush.msra.mxu0 0.0
        %700 = vmatpush.msra.mxu0 0.0
        %701 = vmatpush.msra.mxu0 0.0
        %702 = vmatpush.msra.mxu0 0.0
        %703 = vmatpush.msra.mxu0 0.0
        %704 = vmatpush.msra.mxu0 0.0
        %705 = vmatpush.msra.mxu0 0.0
        %706 = vmatpush.msra.mxu0 0.0
        %707 = vmatpush.msra.mxu0 0.0
        %v708 = vand.u32 %v493, 4294901760
        %v709 = vsub.f32 %v493, %v708
        %710 = vmatpush.msra.mxu0 %v709
        %v711 = vand.u32 %v489, 4294901760
        %v712 = vsub.f32 %v489, %v711
        %713 = vmatmul.f32.gmra.mxu0 %v712
        %v714 = vpop.f32.mrf.mxu0
        %v715 = vadd.f32 %v691, %v714
        %716 = vdwg.mxu0
        %717 = vmatpush.msra.mxu0 0.0
        %718 = vmatpush.msra.mxu0 0.0
        %719 = vmatpush.msra.mxu0 0.0
        %720 = vmatpush.msra.mxu0 0.0
        %721 = vmatpush.msra.mxu0 0.0
        %722 = vmatpush.msra.mxu0 0.0
        %723 = vmatpush.msra.mxu0 0.0
        %724 = vmatpush.msra.mxu0 0.0
        %725 = vmatpush.msra.mxu0 0.0
        %726 = vmatpush.msra.mxu0 0.0
        %727 = vmatpush.msra.mxu0 0.0
        %728 = vmatpush.msra.mxu0 0.0
        %729 = vmatpush.msra.mxu0 0.0
        %730 = vmatpush.msra.mxu0 0.0
        %731 = vmatpush.msra.mxu0 0.0
        %v732 = vand.u32 %v493, 4294901760
        %733 = vmatpush.msra.mxu0 %v732
        %v734 = vand.u32 %v489, 4294901760
        %v735 = vsub.f32 %v489, %v734
        %v736 = vand.u32 %v735, 4294901760
        %737 = vmatmul.f32.gmra.mxu0 %v736
        %v738 = vpop.f32.mrf.mxu0
        %v739 = vadd.f32 %v715, %v738
        %740 = vdwg.mxu0
        %741 = vmatpush.msra.mxu0 0.0
        %742 = vmatpush.msra.mxu0 0.0
        %743 = vmatpush.msra.mxu0 0.0
        %744 = vmatpush.msra.mxu0 0.0
        %745 = vmatpush.msra.mxu0 0.0
        %746 = vmatpush.msra.mxu0 0.0
        %747 = vmatpush.msra.mxu0 0.0
        %748 = vmatpush.msra.mxu0 0.0
        %749 = vmatpush.msra.mxu0 0.0
        %750 = vmatpush.msra.mxu0 0.0
        %751 = vmatpush.msra.mxu0 0.0
        %752 = vmatpush.msra.mxu0 0.0
        %753 = vmatpush.msra.mxu0 0.0
        %754 = vmatpush.msra.mxu0 0.0
        %755 = vmatpush.msra.mxu0 0.0
        %v756 = vand.u32 %v493, 4294901760
        %v757 = vsub.f32 %v493, %v756
        %v758 = vand.u32 %v757, 4294901760
        %759 = vmatpush.msra.mxu0 %v758
        %v760 = vand.u32 %v489, 4294901760
        %761 = vmatmul.f32.gmra.mxu0 %v760
        %v762 = vpop.f32.mrf.mxu0
        %v763 = vadd.f32 %v739, %v762
        %764 = vdwg.mxu0
        %765 = vmatpush.msra.mxu0 0.0
        %766 = vmatpush.msra.mxu0 0.0
        %767 = vmatpush.msra.mxu0 0.0
        %768 = vmatpush.msra.mxu0 0.0
        %769 = vmatpush.msra.mxu0 0.0
        %770 = vmatpush.msra.mxu0 0.0
        %771 = vmatpush.msra.mxu0 0.0
        %772 = vmatpush.msra.mxu0 0.0
        %773 = vmatpush.msra.mxu0 0.0
        %774 = vmatpush.msra.mxu0 0.0
        %775 = vmatpush.msra.mxu0 0.0
        %776 = vmatpush.msra.mxu0 0.0
        %777 = vmatpush.msra.mxu0 0.0
        %778 = vmatpush.msra.mxu0 0.0
        %779 = vmatpush.msra.mxu0 0.0
        %v780 = vand.u32 %v493, 4294901760
        %781 = vmatpush.msra.mxu0 %v780
        %v782 = vand.u32 %v489, 4294901760
        %783 = vmatmul.f32.gmra.mxu0 %v782
        %v784 = vpop.f32.mrf.mxu0
        %v785 = vadd.f32 %v763, %v784
        %786 = vdwg.mxu0
        %v787 = vld [vmem:[%s168] sm:$0xff]
        %s788 = scalar_lea.vmem %s1, 8
        %v789 = vld [vmem:[%s788] sm:$0xf]
        %791 = vst [vmem:[#allocation1] ss:$2 sm:$0xff] %v787
        %v792 = vld.sshfl [vmem:[#allocation1] sm:$0xff pattern:$0x75316420]
        %v793 = vld.sshfl [vmem:[#allocation1 + $0x8] sm:$0xff pattern:$0x75316420]
        %794 = vrot.lane.b32.xlu0 %v792, 126
        %v795 = vpop.permute.xlu0 %794
        %796 = vrot.lane.b32.xlu0 %v793, 126
        %v797 = vpop.permute.xlu0 %796
        %vm798 = vcmask 1031168
        %v799 = vsel %vm798, %v795, %v797
        %v801 = vsel %vm184, %v789, 0
        %v803 = vsel %vm188, %v799, 0
        %v805 = vsel %vm188, %v797, 0
        %807 = vmatpush.msra.mxu0 0.0
        %808 = vmatpush.msra.mxu0 0.0
        %809 = vmatpush.msra.mxu0 0.0
        %810 = vmatpush.msra.mxu0 0.0
        %811 = vmatpush.msra.mxu0 0.0
        %812 = vmatpush.msra.mxu0 0.0
        %813 = vmatpush.msra.mxu0 0.0
        %814 = vmatpush.msra.mxu0 0.0
        %815 = vmatpush.msra.mxu0 0.0
        %816 = vmatpush.msra.mxu0 0.0
        %817 = vmatpush.msra.mxu0 0.0
        %818 = vmatpush.msra.mxu0 0.0
        %819 = vmatpush.msra.mxu0 0.0
        %820 = vmatpush.msra.mxu0 0.0
        %821 = vmatpush.msra.mxu0 0.0
        %v822 = vand.u32 %v803, 4294901760
        %823 = vmatpush.msra.mxu0 %v822
        %v824 = vand.u32 %v801, 4294901760
        %v825 = vsub.f32 %v801, %v824
        %v826 = vand.u32 %v825, 4294901760
        %v827 = vsub.f32 %v825, %v826
        %v828 = vand.u32 %v827, 4294901760
        %829 = vmatmul.f32.gmra.mxu0 %v828
        %v830 = vpop.f32.mrf.mxu0
        %v831 = vadd.f32 0.0, %v830
        %832 = vdwg.mxu0
        %833 = vmatpush.msra.mxu0 0.0
        %834 = vmatpush.msra.mxu0 0.0
        %835 = vmatpush.msra.mxu0 0.0
        %836 = vmatpush.msra.mxu0 0.0
        %837 = vmatpush.msra.mxu0 0.0
        %838 = vmatpush.msra.mxu0 0.0
        %839 = vmatpush.msra.mxu0 0.0
        %840 = vmatpush.msra.mxu0 0.0
        %841 = vmatpush.msra.mxu0 0.0
        %842 = vmatpush.msra.mxu0 0.0
        %843 = vmatpush.msra.mxu0 0.0
        %844 = vmatpush.msra.mxu0 0.0
        %845 = vmatpush.msra.mxu0 0.0
        %846 = vmatpush.msra.mxu0 0.0
        %847 = vmatpush.msra.mxu0 0.0
        %v848 = vand.u32 %v803, 4294901760
        %v849 = vsub.f32 %v803, %v848
        %v850 = vand.u32 %v849, 4294901760
        %v851 = vsub.f32 %v849, %v850
        %v852 = vand.u32 %v851, 4294901760
        %853 = vmatpush.msra.mxu0 %v852
        %v854 = vand.u32 %v801, 4294901760
        %855 = vmatmul.f32.gmra.mxu0 %v854
        %v856 = vpop.f32.mrf.mxu0
        %v857 = vadd.f32 %v831, %v856
        %858 = vdwg.mxu0
        %859 = vmatpush.msra.mxu0 0.0
        %860 = vmatpush.msra.mxu0 0.0
        %861 = vmatpush.msra.mxu0 0.0
        %862 = vmatpush.msra.mxu0 0.0
        %863 = vmatpush.msra.mxu0 0.0
        %864 = vmatpush.msra.mxu0 0.0
        %865 = vmatpush.msra.mxu0 0.0
        %866 = vmatpush.msra.mxu0 0.0
        %867 = vmatpush.msra.mxu0 0.0
        %868 = vmatpush.msra.mxu0 0.0
        %869 = vmatpush.msra.mxu0 0.0
        %870 = vmatpush.msra.mxu0 0.0
        %871 = vmatpush.msra.mxu0 0.0
        %872 = vmatpush.msra.mxu0 0.0
        %873 = vmatpush.msra.mxu0 0.0
        %v874 = vand.u32 %v803, 4294901760
        %v875 = vsub.f32 %v803, %v874
        %876 = vmatpush.msra.mxu0 %v875
        %v877 = vand.u32 %v801, 4294901760
        %v878 = vsub.f32 %v801, %v877
        %879 = vmatmul.f32.gmra.mxu0 %v878
        %v880 = vpop.f32.mrf.mxu0
        %v881 = vadd.f32 %v857, %v880
        %882 = vdwg.mxu0
        %883 = vmatpush.msra.mxu0 0.0
        %884 = vmatpush.msra.mxu0 0.0
        %885 = vmatpush.msra.mxu0 0.0
        %886 = vmatpush.msra.mxu0 0.0
        %887 = vmatpush.msra.mxu0 0.0
        %888 = vmatpush.msra.mxu0 0.0
        %889 = vmatpush.msra.mxu0 0.0
        %890 = vmatpush.msra.mxu0 0.0
        %891 = vmatpush.msra.mxu0 0.0
        %892 = vmatpush.msra.mxu0 0.0
        %893 = vmatpush.msra.mxu0 0.0
        %894 = vmatpush.msra.mxu0 0.0
        %895 = vmatpush.msra.mxu0 0.0
        %896 = vmatpush.msra.mxu0 0.0
        %897 = vmatpush.msra.mxu0 0.0
        %v898 = vand.u32 %v803, 4294901760
        %899 = vmatpush.msra.mxu0 %v898
        %v900 = vand.u32 %v801, 4294901760
        %v901 = vsub.f32 %v801, %v900
        %v902 = vand.u32 %v901, 4294901760
        %903 = vmatmul.f32.gmra.mxu0 %v902
        %v904 = vpop.f32.mrf.mxu0
        %v905 = vadd.f32 %v881, %v904
        %906 = vdwg.mxu0
        %907 = vmatpush.msra.mxu0 0.0
        %908 = vmatpush.msra.mxu0 0.0
        %909 = vmatpush.msra.mxu0 0.0
        %910 = vmatpush.msra.mxu0 0.0
        %911 = vmatpush.msra.mxu0 0.0
        %912 = vmatpush.msra.mxu0 0.0
        %913 = vmatpush.msra.mxu0 0.0
        %914 = vmatpush.msra.mxu0 0.0
        %915 = vmatpush.msra.mxu0 0.0
        %916 = vmatpush.msra.mxu0 0.0
        %917 = vmatpush.msra.mxu0 0.0
        %918 = vmatpush.msra.mxu0 0.0
        %919 = vmatpush.msra.mxu0 0.0
        %920 = vmatpush.msra.mxu0 0.0
        %921 = vmatpush.msra.mxu0 0.0
        %v922 = vand.u32 %v803, 4294901760
        %v923 = vsub.f32 %v803, %v922
        %v924 = vand.u32 %v923, 4294901760
        %925 = vmatpush.msra.mxu0 %v924
        %v926 = vand.u32 %v801, 4294901760
        %927 = vmatmul.f32.gmra.mxu0 %v926
        %v928 = vpop.f32.mrf.mxu0
        %v929 = vadd.f32 %v905, %v928
        %930 = vdwg.mxu0
        %931 = vmatpush.msra.mxu0 0.0
        %932 = vmatpush.msra.mxu0 0.0
        %933 = vmatpush.msra.mxu0 0.0
        %934 = vmatpush.msra.mxu0 0.0
        %935 = vmatpush.msra.mxu0 0.0
        %936 = vmatpush.msra.mxu0 0.0
        %937 = vmatpush.msra.mxu0 0.0
        %938 = vmatpush.msra.mxu0 0.0
        %939 = vmatpush.msra.mxu0 0.0
        %940 = vmatpush.msra.mxu0 0.0
        %941 = vmatpush.msra.mxu0 0.0
        %942 = vmatpush.msra.mxu0 0.0
        %943 = vmatpush.msra.mxu0 0.0
        %944 = vmatpush.msra.mxu0 0.0
        %945 = vmatpush.msra.mxu0 0.0
        %v946 = vand.u32 %v803, 4294901760
        %947 = vmatpush.msra.mxu0 %v946
        %v948 = vand.u32 %v801, 4294901760
        %949 = vmatmul.f32.gmra.mxu0 %v948
        %v950 = vpop.f32.mrf.mxu0
        %v951 = vadd.f32 %v929, %v950
        %952 = vdwg.mxu0
        %953 = vmatpush.msra.mxu0 0.0
        %954 = vmatpush.msra.mxu0 0.0
        %955 = vmatpush.msra.mxu0 0.0
        %956 = vmatpush.msra.mxu0 0.0
        %957 = vmatpush.msra.mxu0 0.0
        %958 = vmatpush.msra.mxu0 0.0
        %959 = vmatpush.msra.mxu0 0.0
        %960 = vmatpush.msra.mxu0 0.0
        %961 = vmatpush.msra.mxu0 0.0
        %962 = vmatpush.msra.mxu0 0.0
        %963 = vmatpush.msra.mxu0 0.0
        %964 = vmatpush.msra.mxu0 0.0
        %965 = vmatpush.msra.mxu0 0.0
        %966 = vmatpush.msra.mxu0 0.0
        %967 = vmatpush.msra.mxu0 0.0
        %v968 = vand.u32 %v805, 4294901760
        %969 = vmatpush.msra.mxu0 %v968
        %v970 = vand.u32 %v801, 4294901760
        %v971 = vsub.f32 %v801, %v970
        %v972 = vand.u32 %v971, 4294901760
        %v973 = vsub.f32 %v971, %v972
        %v974 = vand.u32 %v973, 4294901760
        %975 = vmatmul.f32.gmra.mxu0 %v974
        %v976 = vpop.f32.mrf.mxu0
        %v977 = vadd.f32 0.0, %v976
        %978 = vdwg.mxu0
        %979 = vmatpush.msra.mxu0 0.0
        %980 = vmatpush.msra.mxu0 0.0
        %981 = vmatpush.msra.mxu0 0.0
        %982 = vmatpush.msra.mxu0 0.0
        %983 = vmatpush.msra.mxu0 0.0
        %984 = vmatpush.msra.mxu0 0.0
        %985 = vmatpush.msra.mxu0 0.0
        %986 = vmatpush.msra.mxu0 0.0
        %987 = vmatpush.msra.mxu0 0.0
        %988 = vmatpush.msra.mxu0 0.0
        %989 = vmatpush.msra.mxu0 0.0
        %990 = vmatpush.msra.mxu0 0.0
        %991 = vmatpush.msra.mxu0 0.0
        %992 = vmatpush.msra.mxu0 0.0
        %993 = vmatpush.msra.mxu0 0.0
        %v994 = vand.u32 %v805, 4294901760
        %v995 = vsub.f32 %v805, %v994
        %v996 = vand.u32 %v995, 4294901760
        %v997 = vsub.f32 %v995, %v996
        %v998 = vand.u32 %v997, 4294901760
        %999 = vmatpush.msra.mxu0 %v998
        %v1000 = vand.u32 %v801, 4294901760
        %1001 = vmatmul.f32.gmra.mxu0 %v1000
        %v1002 = vpop.f32.mrf.mxu0
        %v1003 = vadd.f32 %v977, %v1002
        %1004 = vdwg.mxu0
        %1005 = vmatpush.msra.mxu0 0.0
        %1006 = vmatpush.msra.mxu0 0.0
        %1007 = vmatpush.msra.mxu0 0.0
        %1008 = vmatpush.msra.mxu0 0.0
        %1009 = vmatpush.msra.mxu0 0.0
        %1010 = vmatpush.msra.mxu0 0.0
        %1011 = vmatpush.msra.mxu0 0.0
        %1012 = vmatpush.msra.mxu0 0.0
        %1013 = vmatpush.msra.mxu0 0.0
        %1014 = vmatpush.msra.mxu0 0.0
        %1015 = vmatpush.msra.mxu0 0.0
        %1016 = vmatpush.msra.mxu0 0.0
        %1017 = vmatpush.msra.mxu0 0.0
        %1018 = vmatpush.msra.mxu0 0.0
        %1019 = vmatpush.msra.mxu0 0.0
        %v1020 = vand.u32 %v805, 4294901760
        %v1021 = vsub.f32 %v805, %v1020
        %1022 = vmatpush.msra.mxu0 %v1021
        %v1023 = vand.u32 %v801, 4294901760
        %v1024 = vsub.f32 %v801, %v1023
        %1025 = vmatmul.f32.gmra.mxu0 %v1024
        %v1026 = vpop.f32.mrf.mxu0
        %v1027 = vadd.f32 %v1003, %v1026
        %1028 = vdwg.mxu0
        %1029 = vmatpush.msra.mxu0 0.0
        %1030 = vmatpush.msra.mxu0 0.0
        %1031 = vmatpush.msra.mxu0 0.0
        %1032 = vmatpush.msra.mxu0 0.0
        %1033 = vmatpush.msra.mxu0 0.0
        %1034 = vmatpush.msra.mxu0 0.0
        %1035 = vmatpush.msra.mxu0 0.0
        %1036 = vmatpush.msra.mxu0 0.0
        %1037 = vmatpush.msra.mxu0 0.0
        %1038 = vmatpush.msra.mxu0 0.0
        %1039 = vmatpush.msra.mxu0 0.0
        %1040 = vmatpush.msra.mxu0 0.0
        %1041 = vmatpush.msra.mxu0 0.0
        %1042 = vmatpush.msra.mxu0 0.0
        %1043 = vmatpush.msra.mxu0 0.0
        %v1044 = vand.u32 %v805, 4294901760
        %1045 = vmatpush.msra.mxu0 %v1044
        %v1046 = vand.u32 %v801, 4294901760
        %v1047 = vsub.f32 %v801, %v1046
        %v1048 = vand.u32 %v1047, 4294901760
        %1049 = vmatmul.f32.gmra.mxu0 %v1048
        %v1050 = vpop.f32.mrf.mxu0
        %v1051 = vadd.f32 %v1027, %v1050
        %1052 = vdwg.mxu0
        %1053 = vmatpush.msra.mxu0 0.0
        %1054 = vmatpush.msra.mxu0 0.0
        %1055 = vmatpush.msra.mxu0 0.0
        %1056 = vmatpush.msra.mxu0 0.0
        %1057 = vmatpush.msra.mxu0 0.0
        %1058 = vmatpush.msra.mxu0 0.0
        %1059 = vmatpush.msra.mxu0 0.0
        %1060 = vmatpush.msra.mxu0 0.0
        %1061 = vmatpush.msra.mxu0 0.0
        %1062 = vmatpush.msra.mxu0 0.0
        %1063 = vmatpush.msra.mxu0 0.0
        %1064 = vmatpush.msra.mxu0 0.0
        %1065 = vmatpush.msra.mxu0 0.0
        %1066 = vmatpush.msra.mxu0 0.0
        %1067 = vmatpush.msra.mxu0 0.0
        %v1068 = vand.u32 %v805, 4294901760
        %v1069 = vsub.f32 %v805, %v1068
        %v1070 = vand.u32 %v1069, 4294901760
        %1071 = vmatpush.msra.mxu0 %v1070
        %v1072 = vand.u32 %v801, 4294901760
        %1073 = vmatmul.f32.gmra.mxu0 %v1072
        %v1074 = vpop.f32.mrf.mxu0
        %v1075 = vadd.f32 %v1051, %v1074
        %1076 = vdwg.mxu0
        %1077 = vmatpush.msra.mxu0 0.0
        %1078 = vmatpush.msra.mxu0 0.0
        %1079 = vmatpush.msra.mxu0 0.0
        %1080 = vmatpush.msra.mxu0 0.0
        %1081 = vmatpush.msra.mxu0 0.0
        %1082 = vmatpush.msra.mxu0 0.0
        %1083 = vmatpush.msra.mxu0 0.0
        %1084 = vmatpush.msra.mxu0 0.0
        %1085 = vmatpush.msra.mxu0 0.0
        %1086 = vmatpush.msra.mxu0 0.0
        %1087 = vmatpush.msra.mxu0 0.0
        %1088 = vmatpush.msra.mxu0 0.0
        %1089 = vmatpush.msra.mxu0 0.0
        %1090 = vmatpush.msra.mxu0 0.0
        %1091 = vmatpush.msra.mxu0 0.0
        %v1092 = vand.u32 %v805, 4294901760
        %1093 = vmatpush.msra.mxu0 %v1092
        %v1094 = vand.u32 %v801, 4294901760
        %1095 = vmatmul.f32.gmra.mxu0 %v1094
        %v1096 = vpop.f32.mrf.mxu0
        %v1097 = vadd.f32 %v1075, %v1096
        %1098 = vdwg.mxu0
        %v1099 = vadd.f32 %v639, %v951
        %v1100 = vadd.f32 %v785, %v1097
        %v1101 = vld [vmem:[%s168] sm:$0xff]
        %s1102 = scalar_lea.vmem %s1, 12
        %v1103 = vld [vmem:[%s1102] sm:$0xf]
        %1105 = vst [vmem:[#allocation1] ss:$2 sm:$0xff] %v1101
        %v1106 = vld.sshfl [vmem:[#allocation1] sm:$0xff pattern:$0x75316420]
        %v1107 = vld.sshfl [vmem:[#allocation1 + $0x8] sm:$0xff pattern:$0x75316420]
        %1108 = vrot.lane.b32.xlu0 %v1106, 112
        %v1109 = vpop.permute.xlu0 %1108
        %1110 = vrot.lane.b32.xlu0 %v1107, 112
        %v1111 = vpop.permute.xlu0 %1110
        %vm1112 = vcmask 916480
        %v1113 = vsel %vm1112, %v1109, %v1111
        %v1115 = vsel %vm184, %v1103, 0
        %v1117 = vsel %vm188, %v1113, 0
        %v1119 = vsel %vm188, %v1111, 0
        %1121 = vmatpush.msra.mxu0 0.0
        %1122 = vmatpush.msra.mxu0 0.0
        %1123 = vmatpush.msra.mxu0 0.0
        %1124 = vmatpush.msra.mxu0 0.0
        %1125 = vmatpush.msra.mxu0 0.0
        %1126 = vmatpush.msra.mxu0 0.0
        %1127 = vmatpush.msra.mxu0 0.0
        %1128 = vmatpush.msra.mxu0 0.0
        %1129 = vmatpush.msra.mxu0 0.0
        %1130 = vmatpush.msra.mxu0 0.0
        %1131 = vmatpush.msra.mxu0 0.0
        %1132 = vmatpush.msra.mxu0 0.0
        %1133 = vmatpush.msra.mxu0 0.0
        %1134 = vmatpush.msra.mxu0 0.0
        %1135 = vmatpush.msra.mxu0 0.0
        %v1136 = vand.u32 %v1117, 4294901760
        %1137 = vmatpush.msra.mxu0 %v1136
        %v1138 = vand.u32 %v1115, 4294901760
        %v1139 = vsub.f32 %v1115, %v1138
        %v1140 = vand.u32 %v1139, 4294901760
        %v1141 = vsub.f32 %v1139, %v1140
        %v1142 = vand.u32 %v1141, 4294901760
        %1143 = vmatmul.f32.gmra.mxu0 %v1142
        %v1144 = vpop.f32.mrf.mxu0
        %v1145 = vadd.f32 0.0, %v1144
        %1146 = vdwg.mxu0
        %1147 = vmatpush.msra.mxu0 0.0
        %1148 = vmatpush.msra.mxu0 0.0
        %1149 = vmatpush.msra.mxu0 0.0
        %1150 = vmatpush.msra.mxu0 0.0
        %1151 = vmatpush.msra.mxu0 0.0
        %1152 = vmatpush.msra.mxu0 0.0
        %1153 = vmatpush.msra.mxu0 0.0
        %1154 = vmatpush.msra.mxu0 0.0
        %1155 = vmatpush.msra.mxu0 0.0
        %1156 = vmatpush.msra.mxu0 0.0
        %1157 = vmatpush.msra.mxu0 0.0
        %1158 = vmatpush.msra.mxu0 0.0
        %1159 = vmatpush.msra.mxu0 0.0
        %1160 = vmatpush.msra.mxu0 0.0
        %1161 = vmatpush.msra.mxu0 0.0
        %v1162 = vand.u32 %v1117, 4294901760
        %v1163 = vsub.f32 %v1117, %v1162
        %v1164 = vand.u32 %v1163, 4294901760
        %v1165 = vsub.f32 %v1163, %v1164
        %v1166 = vand.u32 %v1165, 4294901760
        %1167 = vmatpush.msra.mxu0 %v1166
        %v1168 = vand.u32 %v1115, 4294901760
        %1169 = vmatmul.f32.gmra.mxu0 %v1168
        %v1170 = vpop.f32.mrf.mxu0
        %v1171 = vadd.f32 %v1145, %v1170
        %1172 = vdwg.mxu0
        %1173 = vmatpush.msra.mxu0 0.0
        %1174 = vmatpush.msra.mxu0 0.0
        %1175 = vmatpush.msra.mxu0 0.0
        %1176 = vmatpush.msra.mxu0 0.0
        %1177 = vmatpush.msra.mxu0 0.0
        %1178 = vmatpush.msra.mxu0 0.0
        %1179 = vmatpush.msra.mxu0 0.0
        %1180 = vmatpush.msra.mxu0 0.0
        %1181 = vmatpush.msra.mxu0 0.0
        %1182 = vmatpush.msra.mxu0 0.0
        %1183 = vmatpush.msra.mxu0 0.0
        %1184 = vmatpush.msra.mxu0 0.0
        %1185 = vmatpush.msra.mxu0 0.0
        %1186 = vmatpush.msra.mxu0 0.0
        %1187 = vmatpush.msra.mxu0 0.0
        %v1188 = vand.u32 %v1117, 4294901760
        %v1189 = vsub.f32 %v1117, %v1188
        %1190 = vmatpush.msra.mxu0 %v1189
        %v1191 = vand.u32 %v1115, 4294901760
        %v1192 = vsub.f32 %v1115, %v1191
        %1193 = vmatmul.f32.gmra.mxu0 %v1192
        %v1194 = vpop.f32.mrf.mxu0
        %v1195 = vadd.f32 %v1171, %v1194
        %1196 = vdwg.mxu0
        %1197 = vmatpush.msra.mxu0 0.0
        %1198 = vmatpush.msra.mxu0 0.0
        %1199 = vmatpush.msra.mxu0 0.0
        %1200 = vmatpush.msra.mxu0 0.0
        %1201 = vmatpush.msra.mxu0 0.0
        %1202 = vmatpush.msra.mxu0 0.0
        %1203 = vmatpush.msra.mxu0 0.0
        %1204 = vmatpush.msra.mxu0 0.0
        %1205 = vmatpush.msra.mxu0 0.0
        %1206 = vmatpush.msra.mxu0 0.0
        %1207 = vmatpush.msra.mxu0 0.0
        %1208 = vmatpush.msra.mxu0 0.0
        %1209 = vmatpush.msra.mxu0 0.0
        %1210 = vmatpush.msra.mxu0 0.0
        %1211 = vmatpush.msra.mxu0 0.0
        %v1212 = vand.u32 %v1117, 4294901760
        %1213 = vmatpush.msra.mxu0 %v1212
        %v1214 = vand.u32 %v1115, 4294901760
        %v1215 = vsub.f32 %v1115, %v1214
        %v1216 = vand.u32 %v1215, 4294901760
        %1217 = vmatmul.f32.gmra.mxu0 %v1216
        %v1218 = vpop.f32.mrf.mxu0
        %v1219 = vadd.f32 %v1195, %v1218
        %1220 = vdwg.mxu0
        %1221 = vmatpush.msra.mxu0 0.0
        %1222 = vmatpush.msra.mxu0 0.0
        %1223 = vmatpush.msra.mxu0 0.0
        %1224 = vmatpush.msra.mxu0 0.0
        %1225 = vmatpush.msra.mxu0 0.0
        %1226 = vmatpush.msra.mxu0 0.0
        %1227 = vmatpush.msra.mxu0 0.0
        %1228 = vmatpush.msra.mxu0 0.0
        %1229 = vmatpush.msra.mxu0 0.0
        %1230 = vmatpush.msra.mxu0 0.0
        %1231 = vmatpush.msra.mxu0 0.0
        %1232 = vmatpush.msra.mxu0 0.0
        %1233 = vmatpush.msra.mxu0 0.0
        %1234 = vmatpush.msra.mxu0 0.0
        %1235 = vmatpush.msra.mxu0 0.0
        %v1236 = vand.u32 %v1117, 4294901760
        %v1237 = vsub.f32 %v1117, %v1236
        %v1238 = vand.u32 %v1237, 4294901760
        %1239 = vmatpush.msra.mxu0 %v1238
        %v1240 = vand.u32 %v1115, 4294901760
        %1241 = vmatmul.f32.gmra.mxu0 %v1240
        %v1242 = vpop.f32.mrf.mxu0
        %v1243 = vadd.f32 %v1219, %v1242
        %1244 = vdwg.mxu0
        %1245 = vmatpush.msra.mxu0 0.0
        %1246 = vmatpush.msra.mxu0 0.0
        %1247 = vmatpush.msra.mxu0 0.0
        %1248 = vmatpush.msra.mxu0 0.0
        %1249 = vmatpush.msra.mxu0 0.0
        %1250 = vmatpush.msra.mxu0 0.0
        %1251 = vmatpush.msra.mxu0 0.0
        %1252 = vmatpush.msra.mxu0 0.0
        %1253 = vmatpush.msra.mxu0 0.0
        %1254 = vmatpush.msra.mxu0 0.0
        %1255 = vmatpush.msra.mxu0 0.0
        %1256 = vmatpush.msra.mxu0 0.0
        %1257 = vmatpush.msra.mxu0 0.0
        %1258 = vmatpush.msra.mxu0 0.0
        %1259 = vmatpush.msra.mxu0 0.0
        %v1260 = vand.u32 %v1117, 4294901760
        %1261 = vmatpush.msra.mxu0 %v1260
        %v1262 = vand.u32 %v1115, 4294901760
        %1263 = vmatmul.f32.gmra.mxu0 %v1262
        %v1264 = vpop.f32.mrf.mxu0
        %v1265 = vadd.f32 %v1243, %v1264
        %1266 = vdwg.mxu0
        %1267 = vmatpush.msra.mxu0 0.0
        %1268 = vmatpush.msra.mxu0 0.0
        %1269 = vmatpush.msra.mxu0 0.0
        %1270 = vmatpush.msra.mxu0 0.0
        %1271 = vmatpush.msra.mxu0 0.0
        %1272 = vmatpush.msra.mxu0 0.0
        %1273 = vmatpush.msra.mxu0 0.0
        %1274 = vmatpush.msra.mxu0 0.0
        %1275 = vmatpush.msra.mxu0 0.0
        %1276 = vmatpush.msra.mxu0 0.0
        %1277 = vmatpush.msra.mxu0 0.0
        %1278 = vmatpush.msra.mxu0 0.0
        %1279 = vmatpush.msra.mxu0 0.0
        %1280 = vmatpush.msra.mxu0 0.0
        %1281 = vmatpush.msra.mxu0 0.0
        %v1282 = vand.u32 %v1119, 4294901760
        %1283 = vmatpush.msra.mxu0 %v1282
        %v1284 = vand.u32 %v1115, 4294901760
        %v1285 = vsub.f32 %v1115, %v1284
        %v1286 = vand.u32 %v1285, 4294901760
        %v1287 = vsub.f32 %v1285, %v1286
        %v1288 = vand.u32 %v1287, 4294901760
        %1289 = vmatmul.f32.gmra.mxu0 %v1288
        %v1290 = vpop.f32.mrf.mxu0
        %v1291 = vadd.f32 0.0, %v1290
        %1292 = vdwg.mxu0
        %1293 = vmatpush.msra.mxu0 0.0
        %1294 = vmatpush.msra.mxu0 0.0
        %1295 = vmatpush.msra.mxu0 0.0
        %1296 = vmatpush.msra.mxu0 0.0
        %1297 = vmatpush.msra.mxu0 0.0
        %1298 = vmatpush.msra.mxu0 0.0
        %1299 = vmatpush.msra.mxu0 0.0
        %1300 = vmatpush.msra.mxu0 0.0
        %1301 = vmatpush.msra.mxu0 0.0
        %1302 = vmatpush.msra.mxu0 0.0
        %1303 = vmatpush.msra.mxu0 0.0
        %1304 = vmatpush.msra.mxu0 0.0
        %1305 = vmatpush.msra.mxu0 0.0
        %1306 = vmatpush.msra.mxu0 0.0
        %1307 = vmatpush.msra.mxu0 0.0
        %v1308 = vand.u32 %v1119, 4294901760
        %v1309 = vsub.f32 %v1119, %v1308
        %v1310 = vand.u32 %v1309, 4294901760
        %v1311 = vsub.f32 %v1309, %v1310
        %v1312 = vand.u32 %v1311, 4294901760
        %1313 = vmatpush.msra.mxu0 %v1312
        %v1314 = vand.u32 %v1115, 4294901760
        %1315 = vmatmul.f32.gmra.mxu0 %v1314
        %v1316 = vpop.f32.mrf.mxu0
        %v1317 = vadd.f32 %v1291, %v1316
        %1318 = vdwg.mxu0
        %1319 = vmatpush.msra.mxu0 0.0
        %1320 = vmatpush.msra.mxu0 0.0
        %1321 = vmatpush.msra.mxu0 0.0
        %1322 = vmatpush.msra.mxu0 0.0
        %1323 = vmatpush.msra.mxu0 0.0
        %1324 = vmatpush.msra.mxu0 0.0
        %1325 = vmatpush.msra.mxu0 0.0
        %1326 = vmatpush.msra.mxu0 0.0
        %1327 = vmatpush.msra.mxu0 0.0
        %1328 = vmatpush.msra.mxu0 0.0
        %1329 = vmatpush.msra.mxu0 0.0
        %1330 = vmatpush.msra.mxu0 0.0
        %1331 = vmatpush.msra.mxu0 0.0
        %1332 = vmatpush.msra.mxu0 0.0
        %1333 = vmatpush.msra.mxu0 0.0
        %v1334 = vand.u32 %v1119, 4294901760
        %v1335 = vsub.f32 %v1119, %v1334
        %1336 = vmatpush.msra.mxu0 %v1335
        %v1337 = vand.u32 %v1115, 4294901760
        %v1338 = vsub.f32 %v1115, %v1337
        %1339 = vmatmul.f32.gmra.mxu0 %v1338
        %v1340 = vpop.f32.mrf.mxu0
        %v1341 = vadd.f32 %v1317, %v1340
        %1342 = vdwg.mxu0
        %1343 = vmatpush.msra.mxu0 0.0
        %1344 = vmatpush.msra.mxu0 0.0
        %1345 = vmatpush.msra.mxu0 0.0
        %1346 = vmatpush.msra.mxu0 0.0
        %1347 = vmatpush.msra.mxu0 0.0
        %1348 = vmatpush.msra.mxu0 0.0
        %1349 = vmatpush.msra.mxu0 0.0
        %1350 = vmatpush.msra.mxu0 0.0
        %1351 = vmatpush.msra.mxu0 0.0
        %1352 = vmatpush.msra.mxu0 0.0
        %1353 = vmatpush.msra.mxu0 0.0
        %1354 = vmatpush.msra.mxu0 0.0
        %1355 = vmatpush.msra.mxu0 0.0
        %1356 = vmatpush.msra.mxu0 0.0
        %1357 = vmatpush.msra.mxu0 0.0
        %v1358 = vand.u32 %v1119, 4294901760
        %1359 = vmatpush.msra.mxu0 %v1358
        %v1360 = vand.u32 %v1115, 4294901760
        %v1361 = vsub.f32 %v1115, %v1360
        %v1362 = vand.u32 %v1361, 4294901760
        %1363 = vmatmul.f32.gmra.mxu0 %v1362
        %v1364 = vpop.f32.mrf.mxu0
        %v1365 = vadd.f32 %v1341, %v1364
        %1366 = vdwg.mxu0
        %1367 = vmatpush.msra.mxu0 0.0
        %1368 = vmatpush.msra.mxu0 0.0
        %1369 = vmatpush.msra.mxu0 0.0
        %1370 = vmatpush.msra.mxu0 0.0
        %1371 = vmatpush.msra.mxu0 0.0
        %1372 = vmatpush.msra.mxu0 0.0
        %1373 = vmatpush.msra.mxu0 0.0
        %1374 = vmatpush.msra.mxu0 0.0
        %1375 = vmatpush.msra.mxu0 0.0
        %1376 = vmatpush.msra.mxu0 0.0
        %1377 = vmatpush.msra.mxu0 0.0
        %1378 = vmatpush.msra.mxu0 0.0
        %1379 = vmatpush.msra.mxu0 0.0
        %1380 = vmatpush.msra.mxu0 0.0
        %1381 = vmatpush.msra.mxu0 0.0
        %v1382 = vand.u32 %v1119, 4294901760
        %v1383 = vsub.f32 %v1119, %v1382
        %v1384 = vand.u32 %v1383, 4294901760
        %1385 = vmatpush.msra.mxu0 %v1384
        %v1386 = vand.u32 %v1115, 4294901760
        %1387 = vmatmul.f32.gmra.mxu0 %v1386
        %v1388 = vpop.f32.mrf.mxu0
        %v1389 = vadd.f32 %v1365, %v1388
        %1390 = vdwg.mxu0
        %1391 = vmatpush.msra.mxu0 0.0
        %1392 = vmatpush.msra.mxu0 0.0
        %1393 = vmatpush.msra.mxu0 0.0
        %1394 = vmatpush.msra.mxu0 0.0
        %1395 = vmatpush.msra.mxu0 0.0
        %1396 = vmatpush.msra.mxu0 0.0
        %1397 = vmatpush.msra.mxu0 0.0
        %1398 = vmatpush.msra.mxu0 0.0
        %1399 = vmatpush.msra.mxu0 0.0
        %1400 = vmatpush.msra.mxu0 0.0
        %1401 = vmatpush.msra.mxu0 0.0
        %1402 = vmatpush.msra.mxu0 0.0
        %1403 = vmatpush.msra.mxu0 0.0
        %1404 = vmatpush.msra.mxu0 0.0
        %1405 = vmatpush.msra.mxu0 0.0
        %v1406 = vand.u32 %v1119, 4294901760
        %1407 = vmatpush.msra.mxu0 %v1406
        %v1408 = vand.u32 %v1115, 4294901760
        %1409 = vmatmul.f32.gmra.mxu0 %v1408
        %v1410 = vpop.f32.mrf.mxu0
        %v1411 = vadd.f32 %v1389, %v1410
        %1412 = vdwg.mxu0
        %v1413 = vadd.f32 %v1099, %v1265
        %v1414 = vadd.f32 %v1100, %v1411
        %v1415 = vld [vmem:[%s168] sm:$0xff]
        %s1416 = scalar_lea.vmem %s1, 16
        %v1417 = vld [vmem:[%s1416] sm:$0xf]
        %1419 = vst [vmem:[#allocation1] ss:$2 sm:$0xff] %v1415
        %v1420 = vld.sshfl [vmem:[#allocation1] sm:$0xff pattern:$0x75316420]
        %v1421 = vld.sshfl [vmem:[#allocation1 + $0x8] sm:$0xff pattern:$0x75316420]
        %1422 = vrot.lane.b32.xlu0 %v1420, 111
        %v1423 = vpop.permute.xlu0 %1422
        %1424 = vrot.lane.b32.xlu0 %v1421, 111
        %v1425 = vpop.permute.xlu0 %1424
        %vm1426 = vcmask 908288
        %v1427 = vsel %vm1426, %v1423, %v1425
        %v1429 = vsel %vm184, %v1417, 0
        %v1431 = vsel %vm188, %v1427, 0
        %v1433 = vsel %vm188, %v1425, 0
        %1435 = vmatpush.msra.mxu0 0.0
        %1436 = vmatpush.msra.mxu0 0.0
        %1437 = vmatpush.msra.mxu0 0.0
        %1438 = vmatpush.msra.mxu0 0.0
        %1439 = vmatpush.msra.mxu0 0.0
        %1440 = vmatpush.msra.mxu0 0.0
        %1441 = vmatpush.msra.mxu0 0.0
        %1442 = vmatpush.msra.mxu0 0.0
        %1443 = vmatpush.msra.mxu0 0.0
        %1444 = vmatpush.msra.mxu0 0.0
        %1445 = vmatpush.msra.mxu0 0.0
        %1446 = vmatpush.msra.mxu0 0.0
        %1447 = vmatpush.msra.mxu0 0.0
        %1448 = vmatpush.msra.mxu0 0.0
        %1449 = vmatpush.msra.mxu0 0.0
        %v1450 = vand.u32 %v1431, 4294901760
        %1451 = vmatpush.msra.mxu0 %v1450
        %v1452 = vand.u32 %v1429, 4294901760
        %v1453 = vsub.f32 %v1429, %v1452
        %v1454 = vand.u32 %v1453, 4294901760
        %v1455 = vsub.f32 %v1453, %v1454
        %v1456 = vand.u32 %v1455, 4294901760
        %1457 = vmatmul.f32.gmra.mxu0 %v1456
        %v1458 = vpop.f32.mrf.mxu0
        %v1459 = vadd.f32 0.0, %v1458
        %1460 = vdwg.mxu0
        %1461 = vmatpush.msra.mxu0 0.0
        %1462 = vmatpush.msra.mxu0 0.0
        %1463 = vmatpush.msra.mxu0 0.0
        %1464 = vmatpush.msra.mxu0 0.0
        %1465 = vmatpush.msra.mxu0 0.0
        %1466 = vmatpush.msra.mxu0 0.0
        %1467 = vmatpush.msra.mxu0 0.0
        %1468 = vmatpush.msra.mxu0 0.0
        %1469 = vmatpush.msra.mxu0 0.0
        %1470 = vmatpush.msra.mxu0 0.0
        %1471 = vmatpush.msra.mxu0 0.0
        %1472 = vmatpush.msra.mxu0 0.0
        %1473 = vmatpush.msra.mxu0 0.0
        %1474 = vmatpush.msra.mxu0 0.0
        %1475 = vmatpush.msra.mxu0 0.0
        %v1476 = vand.u32 %v1431, 4294901760
        %v1477 = vsub.f32 %v1431, %v1476
        %v1478 = vand.u32 %v1477, 4294901760
        %v1479 = vsub.f32 %v1477, %v1478
        %v1480 = vand.u32 %v1479, 4294901760
        %1481 = vmatpush.msra.mxu0 %v1480
        %v1482 = vand.u32 %v1429, 4294901760
        %1483 = vmatmul.f32.gmra.mxu0 %v1482
        %v1484 = vpop.f32.mrf.mxu0
        %v1485 = vadd.f32 %v1459, %v1484
        %1486 = vdwg.mxu0
        %1487 = vmatpush.msra.mxu0 0.0
        %1488 = vmatpush.msra.mxu0 0.0
        %1489 = vmatpush.msra.mxu0 0.0
        %1490 = vmatpush.msra.mxu0 0.0
        %1491 = vmatpush.msra.mxu0 0.0
        %1492 = vmatpush.msra.mxu0 0.0
        %1493 = vmatpush.msra.mxu0 0.0
        %1494 = vmatpush.msra.mxu0 0.0
        %1495 = vmatpush.msra.mxu0 0.0
        %1496 = vmatpush.msra.mxu0 0.0
        %1497 = vmatpush.msra.mxu0 0.0
        %1498 = vmatpush.msra.mxu0 0.0
        %1499 = vmatpush.msra.mxu0 0.0
        %1500 = vmatpush.msra.mxu0 0.0
        %1501 = vmatpush.msra.mxu0 0.0
        %v1502 = vand.u32 %v1431, 4294901760
        %v1503 = vsub.f32 %v1431, %v1502
        %1504 = vmatpush.msra.mxu0 %v1503
        %v1505 = vand.u32 %v1429, 4294901760
        %v1506 = vsub.f32 %v1429, %v1505
        %1507 = vmatmul.f32.gmra.mxu0 %v1506
        %v1508 = vpop.f32.mrf.mxu0
        %v1509 = vadd.f32 %v1485, %v1508
        %1510 = vdwg.mxu0
        %1511 = vmatpush.msra.mxu0 0.0
        %1512 = vmatpush.msra.mxu0 0.0
        %1513 = vmatpush.msra.mxu0 0.0
        %1514 = vmatpush.msra.mxu0 0.0
        %1515 = vmatpush.msra.mxu0 0.0
        %1516 = vmatpush.msra.mxu0 0.0
        %1517 = vmatpush.msra.mxu0 0.0
        %1518 = vmatpush.msra.mxu0 0.0
        %1519 = vmatpush.msra.mxu0 0.0
        %1520 = vmatpush.msra.mxu0 0.0
        %1521 = vmatpush.msra.mxu0 0.0
        %1522 = vmatpush.msra.mxu0 0.0
        %1523 = vmatpush.msra.mxu0 0.0
        %1524 = vmatpush.msra.mxu0 0.0
        %1525 = vmatpush.msra.mxu0 0.0
        %v1526 = vand.u32 %v1431, 4294901760
        %1527 = vmatpush.msra.mxu0 %v1526
        %v1528 = vand.u32 %v1429, 4294901760
        %v1529 = vsub.f32 %v1429, %v1528
        %v1530 = vand.u32 %v1529, 4294901760
        %1531 = vmatmul.f32.gmra.mxu0 %v1530
        %v1532 = vpop.f32.mrf.mxu0
        %v1533 = vadd.f32 %v1509, %v1532
        %1534 = vdwg.mxu0
        %1535 = vmatpush.msra.mxu0 0.0
        %1536 = vmatpush.msra.mxu0 0.0
        %1537 = vmatpush.msra.mxu0 0.0
        %1538 = vmatpush.msra.mxu0 0.0
        %1539 = vmatpush.msra.mxu0 0.0
        %1540 = vmatpush.msra.mxu0 0.0
        %1541 = vmatpush.msra.mxu0 0.0
        %1542 = vmatpush.msra.mxu0 0.0
        %1543 = vmatpush.msra.mxu0 0.0
        %1544 = vmatpush.msra.mxu0 0.0
        %1545 = vmatpush.msra.mxu0 0.0
        %1546 = vmatpush.msra.mxu0 0.0
        %1547 = vmatpush.msra.mxu0 0.0
        %1548 = vmatpush.msra.mxu0 0.0
        %1549 = vmatpush.msra.mxu0 0.0
        %v1550 = vand.u32 %v1431, 4294901760
        %v1551 = vsub.f32 %v1431, %v1550
        %v1552 = vand.u32 %v1551, 4294901760
        %1553 = vmatpush.msra.mxu0 %v1552
        %v1554 = vand.u32 %v1429, 4294901760
        %1555 = vmatmul.f32.gmra.mxu0 %v1554
        %v1556 = vpop.f32.mrf.mxu0
        %v1557 = vadd.f32 %v1533, %v1556
        %1558 = vdwg.mxu0
        %1559 = vmatpush.msra.mxu0 0.0
        %1560 = vmatpush.msra.mxu0 0.0
        %1561 = vmatpush.msra.mxu0 0.0
        %1562 = vmatpush.msra.mxu0 0.0
        %1563 = vmatpush.msra.mxu0 0.0
        %1564 = vmatpush.msra.mxu0 0.0
        %1565 = vmatpush.msra.mxu0 0.0
        %1566 = vmatpush.msra.mxu0 0.0
        %1567 = vmatpush.msra.mxu0 0.0
        %1568 = vmatpush.msra.mxu0 0.0
        %1569 = vmatpush.msra.mxu0 0.0
        %1570 = vmatpush.msra.mxu0 0.0
        %1571 = vmatpush.msra.mxu0 0.0
        %1572 = vmatpush.msra.mxu0 0.0
        %1573 = vmatpush.msra.mxu0 0.0
        %v1574 = vand.u32 %v1431, 4294901760
        %1575 = vmatpush.msra.mxu0 %v1574
        %v1576 = vand.u32 %v1429, 4294901760
        %1577 = vmatmul.f32.gmra.mxu0 %v1576
        %v1578 = vpop.f32.mrf.mxu0
        %v1579 = vadd.f32 %v1557, %v1578
        %1580 = vdwg.mxu0
        %1581 = vmatpush.msra.mxu0 0.0
        %1582 = vmatpush.msra.mxu0 0.0
        %1583 = vmatpush.msra.mxu0 0.0
        %1584 = vmatpush.msra.mxu0 0.0
        %1585 = vmatpush.msra.mxu0 0.0
        %1586 = vmatpush.msra.mxu0 0.0
        %1587 = vmatpush.msra.mxu0 0.0
        %1588 = vmatpush.msra.mxu0 0.0
        %1589 = vmatpush.msra.mxu0 0.0
        %1590 = vmatpush.msra.mxu0 0.0
        %1591 = vmatpush.msra.mxu0 0.0
        %1592 = vmatpush.msra.mxu0 0.0
        %1593 = vmatpush.msra.mxu0 0.0
        %1594 = vmatpush.msra.mxu0 0.0
        %1595 = vmatpush.msra.mxu0 0.0
        %v1596 = vand.u32 %v1433, 4294901760
        %1597 = vmatpush.msra.mxu0 %v1596
        %v1598 = vand.u32 %v1429, 4294901760
        %v1599 = vsub.f32 %v1429, %v1598
        %v1600 = vand.u32 %v1599, 4294901760
        %v1601 = vsub.f32 %v1599, %v1600
        %v1602 = vand.u32 %v1601, 4294901760
        %1603 = vmatmul.f32.gmra.mxu0 %v1602
        %v1604 = vpop.f32.mrf.mxu0
        %v1605 = vadd.f32 0.0, %v1604
        %1606 = vdwg.mxu0
        %1607 = vmatpush.msra.mxu0 0.0
        %1608 = vmatpush.msra.mxu0 0.0
        %1609 = vmatpush.msra.mxu0 0.0
        %1610 = vmatpush.msra.mxu0 0.0
        %1611 = vmatpush.msra.mxu0 0.0
        %1612 = vmatpush.msra.mxu0 0.0
        %1613 = vmatpush.msra.mxu0 0.0
        %1614 = vmatpush.msra.mxu0 0.0
        %1615 = vmatpush.msra.mxu0 0.0
        %1616 = vmatpush.msra.mxu0 0.0
        %1617 = vmatpush.msra.mxu0 0.0
        %1618 = vmatpush.msra.mxu0 0.0
        %1619 = vmatpush.msra.mxu0 0.0
        %1620 = vmatpush.msra.mxu0 0.0
        %1621 = vmatpush.msra.mxu0 0.0
        %v1622 = vand.u32 %v1433, 4294901760
        %v1623 = vsub.f32 %v1433, %v1622
        %v1624 = vand.u32 %v1623, 4294901760
        %v1625 = vsub.f32 %v1623, %v1624
        %v1626 = vand.u32 %v1625, 4294901760
        %1627 = vmatpush.msra.mxu0 %v1626
        %v1628 = vand.u32 %v1429, 4294901760
        %1629 = vmatmul.f32.gmra.mxu0 %v1628
        %v1630 = vpop.f32.mrf.mxu0
        %v1631 = vadd.f32 %v1605, %v1630
        %1632 = vdwg.mxu0
        %1633 = vmatpush.msra.mxu0 0.0
        %1634 = vmatpush.msra.mxu0 0.0
        %1635 = vmatpush.msra.mxu0 0.0
        %1636 = vmatpush.msra.mxu0 0.0
        %1637 = vmatpush.msra.mxu0 0.0
        %1638 = vmatpush.msra.mxu0 0.0
        %1639 = vmatpush.msra.mxu0 0.0
        %1640 = vmatpush.msra.mxu0 0.0
        %1641 = vmatpush.msra.mxu0 0.0
        %1642 = vmatpush.msra.mxu0 0.0
        %1643 = vmatpush.msra.mxu0 0.0
        %1644 = vmatpush.msra.mxu0 0.0
        %1645 = vmatpush.msra.mxu0 0.0
        %1646 = vmatpush.msra.mxu0 0.0
        %1647 = vmatpush.msra.mxu0 0.0
        %v1648 = vand.u32 %v1433, 4294901760
        %v1649 = vsub.f32 %v1433, %v1648
        %1650 = vmatpush.msra.mxu0 %v1649
        %v1651 = vand.u32 %v1429, 4294901760
        %v1652 = vsub.f32 %v1429, %v1651
        %1653 = vmatmul.f32.gmra.mxu0 %v1652
        %v1654 = vpop.f32.mrf.mxu0
        %v1655 = vadd.f32 %v1631, %v1654
        %1656 = vdwg.mxu0
        %1657 = vmatpush.msra.mxu0 0.0
        %1658 = vmatpush.msra.mxu0 0.0
        %1659 = vmatpush.msra.mxu0 0.0
        %1660 = vmatpush.msra.mxu0 0.0
        %1661 = vmatpush.msra.mxu0 0.0
        %1662 = vmatpush.msra.mxu0 0.0
        %1663 = vmatpush.msra.mxu0 0.0
        %1664 = vmatpush.msra.mxu0 0.0
        %1665 = vmatpush.msra.mxu0 0.0
        %1666 = vmatpush.msra.mxu0 0.0
        %1667 = vmatpush.msra.mxu0 0.0
        %1668 = vmatpush.msra.mxu0 0.0
        %1669 = vmatpush.msra.mxu0 0.0
        %1670 = vmatpush.msra.mxu0 0.0
        %1671 = vmatpush.msra.mxu0 0.0
        %v1672 = vand.u32 %v1433, 4294901760
        %1673 = vmatpush.msra.mxu0 %v1672
        %v1674 = vand.u32 %v1429, 4294901760
        %v1675 = vsub.f32 %v1429, %v1674
        %v1676 = vand.u32 %v1675, 4294901760
        %1677 = vmatmul.f32.gmra.mxu0 %v1676
        %v1678 = vpop.f32.mrf.mxu0
        %v1679 = vadd.f32 %v1655, %v1678
        %1680 = vdwg.mxu0
        %1681 = vmatpush.msra.mxu0 0.0
        %1682 = vmatpush.msra.mxu0 0.0
        %1683 = vmatpush.msra.mxu0 0.0
        %1684 = vmatpush.msra.mxu0 0.0
        %1685 = vmatpush.msra.mxu0 0.0
        %1686 = vmatpush.msra.mxu0 0.0
        %1687 = vmatpush.msra.mxu0 0.0
        %1688 = vmatpush.msra.mxu0 0.0
        %1689 = vmatpush.msra.mxu0 0.0
        %1690 = vmatpush.msra.mxu0 0.0
        %1691 = vmatpush.msra.mxu0 0.0
        %1692 = vmatpush.msra.mxu0 0.0
        %1693 = vmatpush.msra.mxu0 0.0
        %1694 = vmatpush.msra.mxu0 0.0
        %1695 = vmatpush.msra.mxu0 0.0
        %v1696 = vand.u32 %v1433, 4294901760
        %v1697 = vsub.f32 %v1433, %v1696
        %v1698 = vand.u32 %v1697, 4294901760
        %1699 = vmatpush.msra.mxu0 %v1698
        %v1700 = vand.u32 %v1429, 4294901760
        %1701 = vmatmul.f32.gmra.mxu0 %v1700
        %v1702 = vpop.f32.mrf.mxu0
        %v1703 = vadd.f32 %v1679, %v1702
        %1704 = vdwg.mxu0
        %1705 = vmatpush.msra.mxu0 0.0
        %1706 = vmatpush.msra.mxu0 0.0
        %1707 = vmatpush.msra.mxu0 0.0
        %1708 = vmatpush.msra.mxu0 0.0
        %1709 = vmatpush.msra.mxu0 0.0
        %1710 = vmatpush.msra.mxu0 0.0
        %1711 = vmatpush.msra.mxu0 0.0
        %1712 = vmatpush.msra.mxu0 0.0
        %1713 = vmatpush.msra.mxu0 0.0
        %1714 = vmatpush.msra.mxu0 0.0
        %1715 = vmatpush.msra.mxu0 0.0
        %1716 = vmatpush.msra.mxu0 0.0
        %1717 = vmatpush.msra.mxu0 0.0
        %1718 = vmatpush.msra.mxu0 0.0
        %1719 = vmatpush.msra.mxu0 0.0
        %v1720 = vand.u32 %v1433, 4294901760
        %1721 = vmatpush.msra.mxu0 %v1720
        %v1722 = vand.u32 %v1429, 4294901760
        %1723 = vmatmul.f32.gmra.mxu0 %v1722
        %v1724 = vpop.f32.mrf.mxu0
        %v1725 = vadd.f32 %v1703, %v1724
        %1726 = vdwg.mxu0
        %v1727 = vadd.f32 %v1413, %v1579
        %v1728 = vadd.f32 %v1414, %v1725
        %v1729 = vld [vmem:[%s168] sm:$0xff]
        %s1730 = scalar_lea.vmem %s1, 20
        %v1731 = vld [vmem:[%s1730] sm:$0xf]
        %1733 = vst [vmem:[#allocation1] ss:$2 sm:$0xff] %v1729
        %v1734 = vld.sshfl [vmem:[#allocation1] sm:$0xff pattern:$0x75316420]
        %v1735 = vld.sshfl [vmem:[#allocation1 + $0x8] sm:$0xff pattern:$0x75316420]
        %1736 = vrot.lane.b32.xlu0 %v1734, 110
        %v1737 = vpop.permute.xlu0 %1736
        %1738 = vrot.lane.b32.xlu0 %v1735, 110
        %v1739 = vpop.permute.xlu0 %1738
        %vm1740 = vcmask 900096
        %v1741 = vsel %vm1740, %v1737, %v1739
        %v1743 = vsel %vm184, %v1731, 0
        %v1745 = vsel %vm188, %v1741, 0
        %v1747 = vsel %vm188, %v1739, 0
        %1749 = vmatpush.msra.mxu0 0.0
        %1750 = vmatpush.msra.mxu0 0.0
        %1751 = vmatpush.msra.mxu0 0.0
        %1752 = vmatpush.msra.mxu0 0.0
        %1753 = vmatpush.msra.mxu0 0.0
        %1754 = vmatpush.msra.mxu0 0.0
        %1755 = vmatpush.msra.mxu0 0.0
        %1756 = vmatpush.msra.mxu0 0.0
        %1757 = vmatpush.msra.mxu0 0.0
        %1758 = vmatpush.msra.mxu0 0.0
        %1759 = vmatpush.msra.mxu0 0.0
        %1760 = vmatpush.msra.mxu0 0.0
        %1761 = vmatpush.msra.mxu0 0.0
        %1762 = vmatpush.msra.mxu0 0.0
        %1763 = vmatpush.msra.mxu0 0.0
        %v1764 = vand.u32 %v1745, 4294901760
        %1765 = vmatpush.msra.mxu0 %v1764
        %v1766 = vand.u32 %v1743, 4294901760
        %v1767 = vsub.f32 %v1743, %v1766
        %v1768 = vand.u32 %v1767, 4294901760
        %v1769 = vsub.f32 %v1767, %v1768
        %v1770 = vand.u32 %v1769, 4294901760
        %1771 = vmatmul.f32.gmra.mxu0 %v1770
        %v1772 = vpop.f32.mrf.mxu0
        %v1773 = vadd.f32 0.0, %v1772
        %1774 = vdwg.mxu0
        %1775 = vmatpush.msra.mxu0 0.0
        %1776 = vmatpush.msra.mxu0 0.0
        %1777 = vmatpush.msra.mxu0 0.0
        %1778 = vmatpush.msra.mxu0 0.0
        %1779 = vmatpush.msra.mxu0 0.0
        %1780 = vmatpush.msra.mxu0 0.0
        %1781 = vmatpush.msra.mxu0 0.0
        %1782 = vmatpush.msra.mxu0 0.0
        %1783 = vmatpush.msra.mxu0 0.0
        %1784 = vmatpush.msra.mxu0 0.0
        %1785 = vmatpush.msra.mxu0 0.0
        %1786 = vmatpush.msra.mxu0 0.0
        %1787 = vmatpush.msra.mxu0 0.0
        %1788 = vmatpush.msra.mxu0 0.0
        %1789 = vmatpush.msra.mxu0 0.0
        %v1790 = vand.u32 %v1745, 4294901760
        %v1791 = vsub.f32 %v1745, %v1790
        %v1792 = vand.u32 %v1791, 4294901760
        %v1793 = vsub.f32 %v1791, %v1792
        %v1794 = vand.u32 %v1793, 4294901760
        %1795 = vmatpush.msra.mxu0 %v1794
        %v1796 = vand.u32 %v1743, 4294901760
        %1797 = vmatmul.f32.gmra.mxu0 %v1796
        %v1798 = vpop.f32.mrf.mxu0
        %v1799 = vadd.f32 %v1773, %v1798
        %1800 = vdwg.mxu0
        %1801 = vmatpush.msra.mxu0 0.0
        %1802 = vmatpush.msra.mxu0 0.0
        %1803 = vmatpush.msra.mxu0 0.0
        %1804 = vmatpush.msra.mxu0 0.0
        %1805 = vmatpush.msra.mxu0 0.0
        %1806 = vmatpush.msra.mxu0 0.0
        %1807 = vmatpush.msra.mxu0 0.0
        %1808 = vmatpush.msra.mxu0 0.0
        %1809 = vmatpush.msra.mxu0 0.0
        %1810 = vmatpush.msra.mxu0 0.0
        %1811 = vmatpush.msra.mxu0 0.0
        %1812 = vmatpush.msra.mxu0 0.0
        %1813 = vmatpush.msra.mxu0 0.0
        %1814 = vmatpush.msra.mxu0 0.0
        %1815 = vmatpush.msra.mxu0 0.0
        %v1816 = vand.u32 %v1745, 4294901760
        %v1817 = vsub.f32 %v1745, %v1816
        %1818 = vmatpush.msra.mxu0 %v1817
        %v1819 = vand.u32 %v1743, 4294901760
        %v1820 = vsub.f32 %v1743, %v1819
        %1821 = vmatmul.f32.gmra.mxu0 %v1820
        %v1822 = vpop.f32.mrf.mxu0
        %v1823 = vadd.f32 %v1799, %v1822
        %1824 = vdwg.mxu0
        %1825 = vmatpush.msra.mxu0 0.0
        %1826 = vmatpush.msra.mxu0 0.0
        %1827 = vmatpush.msra.mxu0 0.0
        %1828 = vmatpush.msra.mxu0 0.0
        %1829 = vmatpush.msra.mxu0 0.0
        %1830 = vmatpush.msra.mxu0 0.0
        %1831 = vmatpush.msra.mxu0 0.0
        %1832 = vmatpush.msra.mxu0 0.0
        %1833 = vmatpush.msra.mxu0 0.0
        %1834 = vmatpush.msra.mxu0 0.0
        %1835 = vmatpush.msra.mxu0 0.0
        %1836 = vmatpush.msra.mxu0 0.0
        %1837 = vmatpush.msra.mxu0 0.0
        %1838 = vmatpush.msra.mxu0 0.0
        %1839 = vmatpush.msra.mxu0 0.0
        %v1840 = vand.u32 %v1745, 4294901760
        %1841 = vmatpush.msra.mxu0 %v1840
        %v1842 = vand.u32 %v1743, 4294901760
        %v1843 = vsub.f32 %v1743, %v1842
        %v1844 = vand.u32 %v1843, 4294901760
        %1845 = vmatmul.f32.gmra.mxu0 %v1844
        %v1846 = vpop.f32.mrf.mxu0
        %v1847 = vadd.f32 %v1823, %v1846
        %1848 = vdwg.mxu0
        %1849 = vmatpush.msra.mxu0 0.0
        %1850 = vmatpush.msra.mxu0 0.0
        %1851 = vmatpush.msra.mxu0 0.0
        %1852 = vmatpush.msra.mxu0 0.0
        %1853 = vmatpush.msra.mxu0 0.0
        %1854 = vmatpush.msra.mxu0 0.0
        %1855 = vmatpush.msra.mxu0 0.0
        %1856 = vmatpush.msra.mxu0 0.0
        %1857 = vmatpush.msra.mxu0 0.0
        %1858 = vmatpush.msra.mxu0 0.0
        %1859 = vmatpush.msra.mxu0 0.0
        %1860 = vmatpush.msra.mxu0 0.0
        %1861 = vmatpush.msra.mxu0 0.0
        %1862 = vmatpush.msra.mxu0 0.0
        %1863 = vmatpush.msra.mxu0 0.0
        %v1864 = vand.u32 %v1745, 4294901760
        %v1865 = vsub.f32 %v1745, %v1864
        %v1866 = vand.u32 %v1865, 4294901760
        %1867 = vmatpush.msra.mxu0 %v1866
        %v1868 = vand.u32 %v1743, 4294901760
        %1869 = vmatmul.f32.gmra.mxu0 %v1868
        %v1870 = vpop.f32.mrf.mxu0
        %v1871 = vadd.f32 %v1847, %v1870
        %1872 = vdwg.mxu0
        %1873 = vmatpush.msra.mxu0 0.0
        %1874 = vmatpush.msra.mxu0 0.0
        %1875 = vmatpush.msra.mxu0 0.0
        %1876 = vmatpush.msra.mxu0 0.0
        %1877 = vmatpush.msra.mxu0 0.0
        %1878 = vmatpush.msra.mxu0 0.0
        %1879 = vmatpush.msra.mxu0 0.0
        %1880 = vmatpush.msra.mxu0 0.0
        %1881 = vmatpush.msra.mxu0 0.0
        %1882 = vmatpush.msra.mxu0 0.0
        %1883 = vmatpush.msra.mxu0 0.0
        %1884 = vmatpush.msra.mxu0 0.0
        %1885 = vmatpush.msra.mxu0 0.0
        %1886 = vmatpush.msra.mxu0 0.0
        %1887 = vmatpush.msra.mxu0 0.0
        %v1888 = vand.u32 %v1745, 4294901760
        %1889 = vmatpush.msra.mxu0 %v1888
        %v1890 = vand.u32 %v1743, 4294901760
        %1891 = vmatmul.f32.gmra.mxu0 %v1890
        %v1892 = vpop.f32.mrf.mxu0
        %v1893 = vadd.f32 %v1871, %v1892
        %1894 = vdwg.mxu0
        %1895 = vmatpush.msra.mxu0 0.0
        %1896 = vmatpush.msra.mxu0 0.0
        %1897 = vmatpush.msra.mxu0 0.0
        %1898 = vmatpush.msra.mxu0 0.0
        %1899 = vmatpush.msra.mxu0 0.0
        %1900 = vmatpush.msra.mxu0 0.0
        %1901 = vmatpush.msra.mxu0 0.0
        %1902 = vmatpush.msra.mxu0 0.0
        %1903 = vmatpush.msra.mxu0 0.0
        %1904 = vmatpush.msra.mxu0 0.0
        %1905 = vmatpush.msra.mxu0 0.0
        %1906 = vmatpush.msra.mxu0 0.0
        %1907 = vmatpush.msra.mxu0 0.0
        %1908 = vmatpush.msra.mxu0 0.0
        %1909 = vmatpush.msra.mxu0 0.0
        %v1910 = vand.u32 %v1747, 4294901760
        %1911 = vmatpush.msra.mxu0 %v1910
        %v1912 = vand.u32 %v1743, 4294901760
        %v1913 = vsub.f32 %v1743, %v1912
        %v1914 = vand.u32 %v1913, 4294901760
        %v1915 = vsub.f32 %v1913, %v1914
        %v1916 = vand.u32 %v1915, 4294901760
        %1917 = vmatmul.f32.gmra.mxu0 %v1916
        %v1918 = vpop.f32.mrf.mxu0
        %v1919 = vadd.f32 0.0, %v1918
        %1920 = vdwg.mxu0
        %1921 = vmatpush.msra.mxu0 0.0
        %1922 = vmatpush.msra.mxu0 0.0
        %1923 = vmatpush.msra.mxu0 0.0
        %1924 = vmatpush.msra.mxu0 0.0
        %1925 = vmatpush.msra.mxu0 0.0
        %1926 = vmatpush.msra.mxu0 0.0
        %1927 = vmatpush.msra.mxu0 0.0
        %1928 = vmatpush.msra.mxu0 0.0
        %1929 = vmatpush.msra.mxu0 0.0
        %1930 = vmatpush.msra.mxu0 0.0
        %1931 = vmatpush.msra.mxu0 0.0
        %1932 = vmatpush.msra.mxu0 0.0
        %1933 = vmatpush.msra.mxu0 0.0
        %1934 = vmatpush.msra.mxu0 0.0
        %1935 = vmatpush.msra.mxu0 0.0
        %v1936 = vand.u32 %v1747, 4294901760
        %v1937 = vsub.f32 %v1747, %v1936
        %v1938 = vand.u32 %v1937, 4294901760
        %v1939 = vsub.f32 %v1937, %v1938
        %v1940 = vand.u32 %v1939, 4294901760
        %1941 = vmatpush.msra.mxu0 %v1940
        %v1942 = vand.u32 %v1743, 4294901760
        %1943 = vmatmul.f32.gmra.mxu0 %v1942
        %v1944 = vpop.f32.mrf.mxu0
        %v1945 = vadd.f32 %v1919, %v1944
        %1946 = vdwg.mxu0
        %1947 = vmatpush.msra.mxu0 0.0
        %1948 = vmatpush.msra.mxu0 0.0
        %1949 = vmatpush.msra.mxu0 0.0
        %1950 = vmatpush.msra.mxu0 0.0
        %1951 = vmatpush.msra.mxu0 0.0
        %1952 = vmatpush.msra.mxu0 0.0
        %1953 = vmatpush.msra.mxu0 0.0
        %1954 = vmatpush.msra.mxu0 0.0
        %1955 = vmatpush.msra.mxu0 0.0
        %1956 = vmatpush.msra.mxu0 0.0
        %1957 = vmatpush.msra.mxu0 0.0
        %1958 = vmatpush.msra.mxu0 0.0
        %1959 = vmatpush.msra.mxu0 0.0
        %1960 = vmatpush.msra.mxu0 0.0
        %1961 = vmatpush.msra.mxu0 0.0
        %v1962 = vand.u32 %v1747, 4294901760
        %v1963 = vsub.f32 %v1747, %v1962
        %1964 = vmatpush.msra.mxu0 %v1963
        %v1965 = vand.u32 %v1743, 4294901760
        %v1966 = vsub.f32 %v1743, %v1965
        %1967 = vmatmul.f32.gmra.mxu0 %v1966
        %v1968 = vpop.f32.mrf.mxu0
        %v1969 = vadd.f32 %v1945, %v1968
        %1970 = vdwg.mxu0
        %1971 = vmatpush.msra.mxu0 0.0
        %1972 = vmatpush.msra.mxu0 0.0
        %1973 = vmatpush.msra.mxu0 0.0
        %1974 = vmatpush.msra.mxu0 0.0
        %1975 = vmatpush.msra.mxu0 0.0
        %1976 = vmatpush.msra.mxu0 0.0
        %1977 = vmatpush.msra.mxu0 0.0
        %1978 = vmatpush.msra.mxu0 0.0
        %1979 = vmatpush.msra.mxu0 0.0
        %1980 = vmatpush.msra.mxu0 0.0
        %1981 = vmatpush.msra.mxu0 0.0
        %1982 = vmatpush.msra.mxu0 0.0
        %1983 = vmatpush.msra.mxu0 0.0
        %1984 = vmatpush.msra.mxu0 0.0
        %1985 = vmatpush.msra.mxu0 0.0
        %v1986 = vand.u32 %v1747, 4294901760
        %1987 = vmatpush.msra.mxu0 %v1986
        %v1988 = vand.u32 %v1743, 4294901760
        %v1989 = vsub.f32 %v1743, %v1988
        %v1990 = vand.u32 %v1989, 4294901760
        %1991 = vmatmul.f32.gmra.mxu0 %v1990
        %v1992 = vpop.f32.mrf.mxu0
        %v1993 = vadd.f32 %v1969, %v1992
        %1994 = vdwg.mxu0
        %1995 = vmatpush.msra.mxu0 0.0
        %1996 = vmatpush.msra.mxu0 0.0
        %1997 = vmatpush.msra.mxu0 0.0
        %1998 = vmatpush.msra.mxu0 0.0
        %1999 = vmatpush.msra.mxu0 0.0
        %2000 = vmatpush.msra.mxu0 0.0
        %2001 = vmatpush.msra.mxu0 0.0
        %2002 = vmatpush.msra.mxu0 0.0
        %2003 = vmatpush.msra.mxu0 0.0
        %2004 = vmatpush.msra.mxu0 0.0
        %2005 = vmatpush.msra.mxu0 0.0
        %2006 = vmatpush.msra.mxu0 0.0
        %2007 = vmatpush.msra.mxu0 0.0
        %2008 = vmatpush.msra.mxu0 0.0
        %2009 = vmatpush.msra.mxu0 0.0
        %v2010 = vand.u32 %v1747, 4294901760
        %v2011 = vsub.f32 %v1747, %v2010
        %v2012 = vand.u32 %v2011, 4294901760
        %2013 = vmatpush.msra.mxu0 %v2012
        %v2014 = vand.u32 %v1743, 4294901760
        %2015 = vmatmul.f32.gmra.mxu0 %v2014
        %v2016 = vpop.f32.mrf.mxu0
        %v2017 = vadd.f32 %v1993, %v2016
        %2018 = vdwg.mxu0
        %2019 = vmatpush.msra.mxu0 0.0
        %2020 = vmatpush.msra.mxu0 0.0
        %2021 = vmatpush.msra.mxu0 0.0
        %2022 = vmatpush.msra.mxu0 0.0
        %2023 = vmatpush.msra.mxu0 0.0
        %2024 = vmatpush.msra.mxu0 0.0
        %2025 = vmatpush.msra.mxu0 0.0
        %2026 = vmatpush.msra.mxu0 0.0
        %2027 = vmatpush.msra.mxu0 0.0
        %2028 = vmatpush.msra.mxu0 0.0
        %2029 = vmatpush.msra.mxu0 0.0
        %2030 = vmatpush.msra.mxu0 0.0
        %2031 = vmatpush.msra.mxu0 0.0
        %2032 = vmatpush.msra.mxu0 0.0
        %2033 = vmatpush.msra.mxu0 0.0
        %v2034 = vand.u32 %v1747, 4294901760
        %2035 = vmatpush.msra.mxu0 %v2034
        %v2036 = vand.u32 %v1743, 4294901760
        %2037 = vmatmul.f32.gmra.mxu0 %v2036
        %v2038 = vpop.f32.mrf.mxu0
        %v2039 = vadd.f32 %v2017, %v2038
        %2040 = vdwg.mxu0
        %v2041 = vadd.f32 %v1727, %v1893
        %v2042 = vadd.f32 %v1728, %v2039
        %v2043 = vld [vmem:[%s168] sm:$0xff]
        %s2044 = scalar_lea.vmem %s1, 24
        %v2045 = vld [vmem:[%s2044] sm:$0xf]
        %2047 = vst [vmem:[#allocation1] ss:$2 sm:$0xff] %v2043
        %v2048 = vld.sshfl [vmem:[#allocation1] sm:$0xff pattern:$0x75316420]
        %v2049 = vld.sshfl [vmem:[#allocation1 + $0x8] sm:$0xff pattern:$0x75316420]
        %2050 = vrot.lane.b32.xlu0 %v2048, 96
        %v2051 = vpop.permute.xlu0 %2050
        %2052 = vrot.lane.b32.xlu0 %v2049, 96
        %v2053 = vpop.permute.xlu0 %2052
        %vm2054 = vcmask 785408
        %v2055 = vsel %vm2054, %v2051, %v2053
        %v2057 = vsel %vm184, %v2045, 0
        %v2059 = vsel %vm188, %v2055, 0
        %v2061 = vsel %vm188, %v2053, 0
        %2063 = vmatpush.msra.mxu0 0.0
        %2064 = vmatpush.msra.mxu0 0.0
        %2065 = vmatpush.msra.mxu0 0.0
        %2066 = vmatpush.msra.mxu0 0.0
        %2067 = vmatpush.msra.mxu0 0.0
        %2068 = vmatpush.msra.mxu0 0.0
        %2069 = vmatpush.msra.mxu0 0.0
        %2070 = vmatpush.msra.mxu0 0.0
        %2071 = vmatpush.msra.mxu0 0.0
        %2072 = vmatpush.msra.mxu0 0.0
        %2073 = vmatpush.msra.mxu0 0.0
        %2074 = vmatpush.msra.mxu0 0.0
        %2075 = vmatpush.msra.mxu0 0.0
        %2076 = vmatpush.msra.mxu0 0.0
        %2077 = vmatpush.msra.mxu0 0.0
        %v2078 = vand.u32 %v2059, 4294901760
        %2079 = vmatpush.msra.mxu0 %v2078
        %v2080 = vand.u32 %v2057, 4294901760
        %v2081 = vsub.f32 %v2057, %v2080
        %v2082 = vand.u32 %v2081, 4294901760
        %v2083 = vsub.f32 %v2081, %v2082
        %v2084 = vand.u32 %v2083, 4294901760
        %2085 = vmatmul.f32.gmra.mxu0 %v2084
        %v2086 = vpop.f32.mrf.mxu0
        %v2087 = vadd.f32 0.0, %v2086
        %2088 = vdwg.mxu0
        %2089 = vmatpush.msra.mxu0 0.0
        %2090 = vmatpush.msra.mxu0 0.0
        %2091 = vmatpush.msra.mxu0 0.0
        %2092 = vmatpush.msra.mxu0 0.0
        %2093 = vmatpush.msra.mxu0 0.0
        %2094 = vmatpush.msra.mxu0 0.0
        %2095 = vmatpush.msra.mxu0 0.0
        %2096 = vmatpush.msra.mxu0 0.0
        %2097 = vmatpush.msra.mxu0 0.0
        %2098 = vmatpush.msra.mxu0 0.0
        %2099 = vmatpush.msra.mxu0 0.0
        %2100 = vmatpush.msra.mxu0 0.0
        %2101 = vmatpush.msra.mxu0 0.0
        %2102 = vmatpush.msra.mxu0 0.0
        %2103 = vmatpush.msra.mxu0 0.0
        %v2104 = vand.u32 %v2059, 4294901760
        %v2105 = vsub.f32 %v2059, %v2104
        %v2106 = vand.u32 %v2105, 4294901760
        %v2107 = vsub.f32 %v2105, %v2106
        %v2108 = vand.u32 %v2107, 4294901760
        %2109 = vmatpush.msra.mxu0 %v2108
        %v2110 = vand.u32 %v2057, 4294901760
        %2111 = vmatmul.f32.gmra.mxu0 %v2110
        %v2112 = vpop.f32.mrf.mxu0
        %v2113 = vadd.f32 %v2087, %v2112
        %2114 = vdwg.mxu0
        %2115 = vmatpush.msra.mxu0 0.0
        %2116 = vmatpush.msra.mxu0 0.0
        %2117 = vmatpush.msra.mxu0 0.0
        %2118 = vmatpush.msra.mxu0 0.0
        %2119 = vmatpush.msra.mxu0 0.0
        %2120 = vmatpush.msra.mxu0 0.0
        %2121 = vmatpush.msra.mxu0 0.0
        %2122 = vmatpush.msra.mxu0 0.0
        %2123 = vmatpush.msra.mxu0 0.0
        %2124 = vmatpush.msra.mxu0 0.0
        %2125 = vmatpush.msra.mxu0 0.0
        %2126 = vmatpush.msra.mxu0 0.0
        %2127 = vmatpush.msra.mxu0 0.0
        %2128 = vmatpush.msra.mxu0 0.0
        %2129 = vmatpush.msra.mxu0 0.0
        %v2130 = vand.u32 %v2059, 4294901760
        %v2131 = vsub.f32 %v2059, %v2130
        %2132 = vmatpush.msra.mxu0 %v2131
        %v2133 = vand.u32 %v2057, 4294901760
        %v2134 = vsub.f32 %v2057, %v2133
        %2135 = vmatmul.f32.gmra.mxu0 %v2134
        %v2136 = vpop.f32.mrf.mxu0
        %v2137 = vadd.f32 %v2113, %v2136
        %2138 = vdwg.mxu0
        %2139 = vmatpush.msra.mxu0 0.0
        %2140 = vmatpush.msra.mxu0 0.0
        %2141 = vmatpush.msra.mxu0 0.0
        %2142 = vmatpush.msra.mxu0 0.0
        %2143 = vmatpush.msra.mxu0 0.0
        %2144 = vmatpush.msra.mxu0 0.0
        %2145 = vmatpush.msra.mxu0 0.0
        %2146 = vmatpush.msra.mxu0 0.0
        %2147 = vmatpush.msra.mxu0 0.0
        %2148 = vmatpush.msra.mxu0 0.0
        %2149 = vmatpush.msra.mxu0 0.0
        %2150 = vmatpush.msra.mxu0 0.0
        %2151 = vmatpush.msra.mxu0 0.0
        %2152 = vmatpush.msra.mxu0 0.0
        %2153 = vmatpush.msra.mxu0 0.0
        %v2154 = vand.u32 %v2059, 4294901760
        %2155 = vmatpush.msra.mxu0 %v2154
        %v2156 = vand.u32 %v2057, 4294901760
        %v2157 = vsub.f32 %v2057, %v2156
        %v2158 = vand.u32 %v2157, 4294901760
        %2159 = vmatmul.f32.gmra.mxu0 %v2158
        %v2160 = vpop.f32.mrf.mxu0
        %v2161 = vadd.f32 %v2137, %v2160
        %2162 = vdwg.mxu0
        %2163 = vmatpush.msra.mxu0 0.0
        %2164 = vmatpush.msra.mxu0 0.0
        %2165 = vmatpush.msra.mxu0 0.0
        %2166 = vmatpush.msra.mxu0 0.0
        %2167 = vmatpush.msra.mxu0 0.0
        %2168 = vmatpush.msra.mxu0 0.0
        %2169 = vmatpush.msra.mxu0 0.0
        %2170 = vmatpush.msra.mxu0 0.0
        %2171 = vmatpush.msra.mxu0 0.0
        %2172 = vmatpush.msra.mxu0 0.0
        %2173 = vmatpush.msra.mxu0 0.0
        %2174 = vmatpush.msra.mxu0 0.0
        %2175 = vmatpush.msra.mxu0 0.0
        %2176 = vmatpush.msra.mxu0 0.0
        %2177 = vmatpush.msra.mxu0 0.0
        %v2178 = vand.u32 %v2059, 4294901760
        %v2179 = vsub.f32 %v2059, %v2178
        %v2180 = vand.u32 %v2179, 4294901760
        %2181 = vmatpush.msra.mxu0 %v2180
        %v2182 = vand.u32 %v2057, 4294901760
        %2183 = vmatmul.f32.gmra.mxu0 %v2182
        %v2184 = vpop.f32.mrf.mxu0
        %v2185 = vadd.f32 %v2161, %v2184
        %2186 = vdwg.mxu0
        %2187 = vmatpush.msra.mxu0 0.0
        %2188 = vmatpush.msra.mxu0 0.0
        %2189 = vmatpush.msra.mxu0 0.0
        %2190 = vmatpush.msra.mxu0 0.0
        %2191 = vmatpush.msra.mxu0 0.0
        %2192 = vmatpush.msra.mxu0 0.0
        %2193 = vmatpush.msra.mxu0 0.0
        %2194 = vmatpush.msra.mxu0 0.0
        %2195 = vmatpush.msra.mxu0 0.0
        %2196 = vmatpush.msra.mxu0 0.0
        %2197 = vmatpush.msra.mxu0 0.0
        %2198 = vmatpush.msra.mxu0 0.0
        %2199 = vmatpush.msra.mxu0 0.0
        %2200 = vmatpush.msra.mxu0 0.0
        %2201 = vmatpush.msra.mxu0 0.0
        %v2202 = vand.u32 %v2059, 4294901760
        %2203 = vmatpush.msra.mxu0 %v2202
        %v2204 = vand.u32 %v2057, 4294901760
        %2205 = vmatmul.f32.gmra.mxu0 %v2204
        %v2206 = vpop.f32.mrf.mxu0
        %v2207 = vadd.f32 %v2185, %v2206
        %2208 = vdwg.mxu0
        %2209 = vmatpush.msra.mxu0 0.0
        %2210 = vmatpush.msra.mxu0 0.0
        %2211 = vmatpush.msra.mxu0 0.0
        %2212 = vmatpush.msra.mxu0 0.0
        %2213 = vmatpush.msra.mxu0 0.0
        %2214 = vmatpush.msra.mxu0 0.0
        %2215 = vmatpush.msra.mxu0 0.0
        %2216 = vmatpush.msra.mxu0 0.0
        %2217 = vmatpush.msra.mxu0 0.0
        %2218 = vmatpush.msra.mxu0 0.0
        %2219 = vmatpush.msra.mxu0 0.0
        %2220 = vmatpush.msra.mxu0 0.0
        %2221 = vmatpush.msra.mxu0 0.0
        %2222 = vmatpush.msra.mxu0 0.0
        %2223 = vmatpush.msra.mxu0 0.0
        %v2224 = vand.u32 %v2061, 4294901760
        %2225 = vmatpush.msra.mxu0 %v2224
        %v2226 = vand.u32 %v2057, 4294901760
        %v2227 = vsub.f32 %v2057, %v2226
        %v2228 = vand.u32 %v2227, 4294901760
        %v2229 = vsub.f32 %v2227, %v2228
        %v2230 = vand.u32 %v2229, 4294901760
        %2231 = vmatmul.f32.gmra.mxu0 %v2230
        %v2232 = vpop.f32.mrf.mxu0
        %v2233 = vadd.f32 0.0, %v2232
        %2234 = vdwg.mxu0
        %2235 = vmatpush.msra.mxu0 0.0
        %2236 = vmatpush.msra.mxu0 0.0
        %2237 = vmatpush.msra.mxu0 0.0
        %2238 = vmatpush.msra.mxu0 0.0
        %2239 = vmatpush.msra.mxu0 0.0
        %2240 = vmatpush.msra.mxu0 0.0
        %2241 = vmatpush.msra.mxu0 0.0
        %2242 = vmatpush.msra.mxu0 0.0
        %2243 = vmatpush.msra.mxu0 0.0
        %2244 = vmatpush.msra.mxu0 0.0
        %2245 = vmatpush.msra.mxu0 0.0
        %2246 = vmatpush.msra.mxu0 0.0
        %2247 = vmatpush.msra.mxu0 0.0
        %2248 = vmatpush.msra.mxu0 0.0
        %2249 = vmatpush.msra.mxu0 0.0
        %v2250 = vand.u32 %v2061, 4294901760
        %v2251 = vsub.f32 %v2061, %v2250
        %v2252 = vand.u32 %v2251, 4294901760
        %v2253 = vsub.f32 %v2251, %v2252
        %v2254 = vand.u32 %v2253, 4294901760
        %2255 = vmatpush.msra.mxu0 %v2254
        %v2256 = vand.u32 %v2057, 4294901760
        %2257 = vmatmul.f32.gmra.mxu0 %v2256
        %v2258 = vpop.f32.mrf.mxu0
        %v2259 = vadd.f32 %v2233, %v2258
        %2260 = vdwg.mxu0
        %2261 = vmatpush.msra.mxu0 0.0
        %2262 = vmatpush.msra.mxu0 0.0
        %2263 = vmatpush.msra.mxu0 0.0
        %2264 = vmatpush.msra.mxu0 0.0
        %2265 = vmatpush.msra.mxu0 0.0
        %2266 = vmatpush.msra.mxu0 0.0
        %2267 = vmatpush.msra.mxu0 0.0
        %2268 = vmatpush.msra.mxu0 0.0
        %2269 = vmatpush.msra.mxu0 0.0
        %2270 = vmatpush.msra.mxu0 0.0
        %2271 = vmatpush.msra.mxu0 0.0
        %2272 = vmatpush.msra.mxu0 0.0
        %2273 = vmatpush.msra.mxu0 0.0
        %2274 = vmatpush.msra.mxu0 0.0
        %2275 = vmatpush.msra.mxu0 0.0
        %v2276 = vand.u32 %v2061, 4294901760
        %v2277 = vsub.f32 %v2061, %v2276
        %2278 = vmatpush.msra.mxu0 %v2277
        %v2279 = vand.u32 %v2057, 4294901760
        %v2280 = vsub.f32 %v2057, %v2279
        %2281 = vmatmul.f32.gmra.mxu0 %v2280
        %v2282 = vpop.f32.mrf.mxu0
        %v2283 = vadd.f32 %v2259, %v2282
        %2284 = vdwg.mxu0
        %2285 = vmatpush.msra.mxu0 0.0
        %2286 = vmatpush.msra.mxu0 0.0
        %2287 = vmatpush.msra.mxu0 0.0
        %2288 = vmatpush.msra.mxu0 0.0
        %2289 = vmatpush.msra.mxu0 0.0
        %2290 = vmatpush.msra.mxu0 0.0
        %2291 = vmatpush.msra.mxu0 0.0
        %2292 = vmatpush.msra.mxu0 0.0
        %2293 = vmatpush.msra.mxu0 0.0
        %2294 = vmatpush.msra.mxu0 0.0
        %2295 = vmatpush.msra.mxu0 0.0
        %2296 = vmatpush.msra.mxu0 0.0
        %2297 = vmatpush.msra.mxu0 0.0
        %2298 = vmatpush.msra.mxu0 0.0
        %2299 = vmatpush.msra.mxu0 0.0
        %v2300 = vand.u32 %v2061, 4294901760
        %2301 = vmatpush.msra.mxu0 %v2300
        %v2302 = vand.u32 %v2057, 4294901760
        %v2303 = vsub.f32 %v2057, %v2302
        %v2304 = vand.u32 %v2303, 4294901760
        %2305 = vmatmul.f32.gmra.mxu0 %v2304
        %v2306 = vpop.f32.mrf.mxu0
        %v2307 = vadd.f32 %v2283, %v2306
        %2308 = vdwg.mxu0
        %2309 = vmatpush.msra.mxu0 0.0
        %2310 = vmatpush.msra.mxu0 0.0
        %2311 = vmatpush.msra.mxu0 0.0
        %2312 = vmatpush.msra.mxu0 0.0
        %2313 = vmatpush.msra.mxu0 0.0
        %2314 = vmatpush.msra.mxu0 0.0
        %2315 = vmatpush.msra.mxu0 0.0
        %2316 = vmatpush.msra.mxu0 0.0
        %2317 = vmatpush.msra.mxu0 0.0
        %2318 = vmatpush.msra.mxu0 0.0
        %2319 = vmatpush.msra.mxu0 0.0
        %2320 = vmatpush.msra.mxu0 0.0
        %2321 = vmatpush.msra.mxu0 0.0
        %2322 = vmatpush.msra.mxu0 0.0
        %2323 = vmatpush.msra.mxu0 0.0
        %v2324 = vand.u32 %v2061, 4294901760
        %v2325 = vsub.f32 %v2061, %v2324
        %v2326 = vand.u32 %v2325, 4294901760
        %2327 = vmatpush.msra.mxu0 %v2326
        %v2328 = vand.u32 %v2057, 4294901760
        %2329 = vmatmul.f32.gmra.mxu0 %v2328
        %v2330 = vpop.f32.mrf.mxu0
        %v2331 = vadd.f32 %v2307, %v2330
        %2332 = vdwg.mxu0
        %2333 = vmatpush.msra.mxu0 0.0
        %2334 = vmatpush.msra.mxu0 0.0
        %2335 = vmatpush.msra.mxu0 0.0
        %2336 = vmatpush.msra.mxu0 0.0
        %2337 = vmatpush.msra.mxu0 0.0
        %2338 = vmatpush.msra.mxu0 0.0
        %2339 = vmatpush.msra.mxu0 0.0
        %2340 = vmatpush.msra.mxu0 0.0
        %2341 = vmatpush.msra.mxu0 0.0
        %2342 = vmatpush.msra.mxu0 0.0
        %2343 = vmatpush.msra.mxu0 0.0
        %2344 = vmatpush.msra.mxu0 0.0
        %2345 = vmatpush.msra.mxu0 0.0
        %2346 = vmatpush.msra.mxu0 0.0
        %2347 = vmatpush.msra.mxu0 0.0
        %v2348 = vand.u32 %v2061, 4294901760
        %2349 = vmatpush.msra.mxu0 %v2348
        %v2350 = vand.u32 %v2057, 4294901760
        %2351 = vmatmul.f32.gmra.mxu0 %v2350
        %v2352 = vpop.f32.mrf.mxu0
        %v2353 = vadd.f32 %v2331, %v2352
        %2354 = vdwg.mxu0
        %v2355 = vadd.f32 %v2041, %v2207
        %v2356 = vadd.f32 %v2042, %v2353
        %v2357 = vld [vmem:[%s168] sm:$0xff]
        %v2358 = vld [vmem:[%s168 + $0x8] sm:$0xf]
        %s2359 = scalar_lea.vmem %s1, 28
        %v2360 = vld [vmem:[%s2359] sm:$0xf]
        %2363 = vst [vmem:[#allocation1] ss:$2 sm:$0xff] %v2357
        %s2364 = scalar_lea.vmem [#allocation1], 16
        %2365 = vst [vmem:[%s2364] ss:$2 sm:$0xff] %v2358
        %v2366 = vld.sshfl [vmem:[#allocation1] sm:$0xff pattern:$0x75316420]
        %v2367 = vld.sshfl [vmem:[#allocation1 + $0x8] sm:$0xff pattern:$0x75316420]
        %v2368 = vld.sshfl [vmem:[#allocation1 + $0x10] sm:$0xff pattern:$0x75316420]
        %2369 = vrot.lane.b32.xlu0 %v2366, 95
        %v2370 = vpop.permute.xlu0 %2369
        %2371 = vrot.lane.b32.xlu0 %v2367, 95
        %v2372 = vpop.permute.xlu0 %2371
        %2373 = vrot.lane.b32.xlu0 %v2368, 95
        %v2374 = vpop.permute.xlu0 %2373
        %vm2375 = vcmask 777216
        %v2376 = vsel %vm2375, %v2370, %v2372
        %v2377 = vsel %vm2375, %v2372, %v2374
        %v2379 = vsel %vm184, %v2360, 0
        %v2381 = vsel %vm188, %v2376, 0
        %v2383 = vsel %vm188, %v2377, 0
        %2385 = vmatpush.msra.mxu0 0.0
        %2386 = vmatpush.msra.mxu0 0.0
        %2387 = vmatpush.msra.mxu0 0.0
        %2388 = vmatpush.msra.mxu0 0.0
        %2389 = vmatpush.msra.mxu0 0.0
        %2390 = vmatpush.msra.mxu0 0.0
        %2391 = vmatpush.msra.mxu0 0.0
        %2392 = vmatpush.msra.mxu0 0.0
        %2393 = vmatpush.msra.mxu0 0.0
        %2394 = vmatpush.msra.mxu0 0.0
        %2395 = vmatpush.msra.mxu0 0.0
        %2396 = vmatpush.msra.mxu0 0.0
        %2397 = vmatpush.msra.mxu0 0.0
        %2398 = vmatpush.msra.mxu0 0.0
        %2399 = vmatpush.msra.mxu0 0.0
        %v2400 = vand.u32 %v2381, 4294901760
        %2401 = vmatpush.msra.mxu0 %v2400
        %v2402 = vand.u32 %v2379, 4294901760
        %v2403 = vsub.f32 %v2379, %v2402
        %v2404 = vand.u32 %v2403, 4294901760
        %v2405 = vsub.f32 %v2403, %v2404
        %v2406 = vand.u32 %v2405, 4294901760
        %2407 = vmatmul.f32.gmra.mxu0 %v2406
        %v2408 = vpop.f32.mrf.mxu0
        %v2409 = vadd.f32 0.0, %v2408
        %2410 = vdwg.mxu0
        %2411 = vmatpush.msra.mxu0 0.0
        %2412 = vmatpush.msra.mxu0 0.0
        %2413 = vmatpush.msra.mxu0 0.0
        %2414 = vmatpush.msra.mxu0 0.0
        %2415 = vmatpush.msra.mxu0 0.0
        %2416 = vmatpush.msra.mxu0 0.0
        %2417 = vmatpush.msra.mxu0 0.0
        %2418 = vmatpush.msra.mxu0 0.0
        %2419 = vmatpush.msra.mxu0 0.0
        %2420 = vmatpush.msra.mxu0 0.0
        %2421 = vmatpush.msra.mxu0 0.0
        %2422 = vmatpush.msra.mxu0 0.0
        %2423 = vmatpush.msra.mxu0 0.0
        %2424 = vmatpush.msra.mxu0 0.0
        %2425 = vmatpush.msra.mxu0 0.0
        %v2426 = vand.u32 %v2381, 4294901760
        %v2427 = vsub.f32 %v2381, %v2426
        %v2428 = vand.u32 %v2427, 4294901760
        %v2429 = vsub.f32 %v2427, %v2428
        %v2430 = vand.u32 %v2429, 4294901760
        %2431 = vmatpush.msra.mxu0 %v2430
        %v2432 = vand.u32 %v2379, 4294901760
        %2433 = vmatmul.f32.gmra.mxu0 %v2432
        %v2434 = vpop.f32.mrf.mxu0
        %v2435 = vadd.f32 %v2409, %v2434
        %2436 = vdwg.mxu0
        %2437 = vmatpush.msra.mxu0 0.0
        %2438 = vmatpush.msra.mxu0 0.0
        %2439 = vmatpush.msra.mxu0 0.0
        %2440 = vmatpush.msra.mxu0 0.0
        %2441 = vmatpush.msra.mxu0 0.0
        %2442 = vmatpush.msra.mxu0 0.0
        %2443 = vmatpush.msra.mxu0 0.0
        %2444 = vmatpush.msra.mxu0 0.0
        %2445 = vmatpush.msra.mxu0 0.0
        %2446 = vmatpush.msra.mxu0 0.0
        %2447 = vmatpush.msra.mxu0 0.0
        %2448 = vmatpush.msra.mxu0 0.0
        %2449 = vmatpush.msra.mxu0 0.0
        %2450 = vmatpush.msra.mxu0 0.0
        %2451 = vmatpush.msra.mxu0 0.0
        %v2452 = vand.u32 %v2381, 4294901760
        %v2453 = vsub.f32 %v2381, %v2452
        %2454 = vmatpush.msra.mxu0 %v2453
        %v2455 = vand.u32 %v2379, 4294901760
        %v2456 = vsub.f32 %v2379, %v2455
        %2457 = vmatmul.f32.gmra.mxu0 %v2456
        %v2458 = vpop.f32.mrf.mxu0
        %v2459 = vadd.f32 %v2435, %v2458
        %2460 = vdwg.mxu0
        %2461 = vmatpush.msra.mxu0 0.0
        %2462 = vmatpush.msra.mxu0 0.0
        %2463 = vmatpush.msra.mxu0 0.0
        %2464 = vmatpush.msra.mxu0 0.0
        %2465 = vmatpush.msra.mxu0 0.0
        %2466 = vmatpush.msra.mxu0 0.0
        %2467 = vmatpush.msra.mxu0 0.0
        %2468 = vmatpush.msra.mxu0 0.0
        %2469 = vmatpush.msra.mxu0 0.0
        %2470 = vmatpush.msra.mxu0 0.0
        %2471 = vmatpush.msra.mxu0 0.0
        %2472 = vmatpush.msra.mxu0 0.0
        %2473 = vmatpush.msra.mxu0 0.0
        %2474 = vmatpush.msra.mxu0 0.0
        %2475 = vmatpush.msra.mxu0 0.0
        %v2476 = vand.u32 %v2381, 4294901760
        %2477 = vmatpush.msra.mxu0 %v2476
        %v2478 = vand.u32 %v2379, 4294901760
        %v2479 = vsub.f32 %v2379, %v2478
        %v2480 = vand.u32 %v2479, 4294901760
        %2481 = vmatmul.f32.gmra.mxu0 %v2480
        %v2482 = vpop.f32.mrf.mxu0
        %v2483 = vadd.f32 %v2459, %v2482
        %2484 = vdwg.mxu0
        %2485 = vmatpush.msra.mxu0 0.0
        %2486 = vmatpush.msra.mxu0 0.0
        %2487 = vmatpush.msra.mxu0 0.0
        %2488 = vmatpush.msra.mxu0 0.0
        %2489 = vmatpush.msra.mxu0 0.0
        %2490 = vmatpush.msra.mxu0 0.0
        %2491 = vmatpush.msra.mxu0 0.0
        %2492 = vmatpush.msra.mxu0 0.0
        %2493 = vmatpush.msra.mxu0 0.0
        %2494 = vmatpush.msra.mxu0 0.0
        %2495 = vmatpush.msra.mxu0 0.0
        %2496 = vmatpush.msra.mxu0 0.0
        %2497 = vmatpush.msra.mxu0 0.0
        %2498 = vmatpush.msra.mxu0 0.0
        %2499 = vmatpush.msra.mxu0 0.0
        %v2500 = vand.u32 %v2381, 4294901760
        %v2501 = vsub.f32 %v2381, %v2500
        %v2502 = vand.u32 %v2501, 4294901760
        %2503 = vmatpush.msra.mxu0 %v2502
        %v2504 = vand.u32 %v2379, 4294901760
        %2505 = vmatmul.f32.gmra.mxu0 %v2504
        %v2506 = vpop.f32.mrf.mxu0
        %v2507 = vadd.f32 %v2483, %v2506
        %2508 = vdwg.mxu0
        %2509 = vmatpush.msra.mxu0 0.0
        %2510 = vmatpush.msra.mxu0 0.0
        %2511 = vmatpush.msra.mxu0 0.0
        %2512 = vmatpush.msra.mxu0 0.0
        %2513 = vmatpush.msra.mxu0 0.0
        %2514 = vmatpush.msra.mxu0 0.0
        %2515 = vmatpush.msra.mxu0 0.0
        %2516 = vmatpush.msra.mxu0 0.0
        %2517 = vmatpush.msra.mxu0 0.0
        %2518 = vmatpush.msra.mxu0 0.0
        %2519 = vmatpush.msra.mxu0 0.0
        %2520 = vmatpush.msra.mxu0 0.0
        %2521 = vmatpush.msra.mxu0 0.0
        %2522 = vmatpush.msra.mxu0 0.0
        %2523 = vmatpush.msra.mxu0 0.0
        %v2524 = vand.u32 %v2381, 4294901760
        %2525 = vmatpush.msra.mxu0 %v2524
        %v2526 = vand.u32 %v2379, 4294901760
        %2527 = vmatmul.f32.gmra.mxu0 %v2526
        %v2528 = vpop.f32.mrf.mxu0
        %v2529 = vadd.f32 %v2507, %v2528
        %2530 = vdwg.mxu0
        %2531 = vmatpush.msra.mxu0 0.0
        %2532 = vmatpush.msra.mxu0 0.0
        %2533 = vmatpush.msra.mxu0 0.0
        %2534 = vmatpush.msra.mxu0 0.0
        %2535 = vmatpush.msra.mxu0 0.0
        %2536 = vmatpush.msra.mxu0 0.0
        %2537 = vmatpush.msra.mxu0 0.0
        %2538 = vmatpush.msra.mxu0 0.0
        %2539 = vmatpush.msra.mxu0 0.0
        %2540 = vmatpush.msra.mxu0 0.0
        %2541 = vmatpush.msra.mxu0 0.0
        %2542 = vmatpush.msra.mxu0 0.0
        %2543 = vmatpush.msra.mxu0 0.0
        %2544 = vmatpush.msra.mxu0 0.0
        %2545 = vmatpush.msra.mxu0 0.0
        %v2546 = vand.u32 %v2383, 4294901760
        %2547 = vmatpush.msra.mxu0 %v2546
        %v2548 = vand.u32 %v2379, 4294901760
        %v2549 = vsub.f32 %v2379, %v2548
        %v2550 = vand.u32 %v2549, 4294901760
        %v2551 = vsub.f32 %v2549, %v2550
        %v2552 = vand.u32 %v2551, 4294901760
        %2553 = vmatmul.f32.gmra.mxu0 %v2552
        %v2554 = vpop.f32.mrf.mxu0
        %v2555 = vadd.f32 0.0, %v2554
        %2556 = vdwg.mxu0
        %2557 = vmatpush.msra.mxu0 0.0
        %2558 = vmatpush.msra.mxu0 0.0
        %2559 = vmatpush.msra.mxu0 0.0
        %2560 = vmatpush.msra.mxu0 0.0
        %2561 = vmatpush.msra.mxu0 0.0
        %2562 = vmatpush.msra.mxu0 0.0
        %2563 = vmatpush.msra.mxu0 0.0
        %2564 = vmatpush.msra.mxu0 0.0
        %2565 = vmatpush.msra.mxu0 0.0
        %2566 = vmatpush.msra.mxu0 0.0
        %2567 = vmatpush.msra.mxu0 0.0
        %2568 = vmatpush.msra.mxu0 0.0
        %2569 = vmatpush.msra.mxu0 0.0
        %2570 = vmatpush.msra.mxu0 0.0
        %2571 = vmatpush.msra.mxu0 0.0
        %v2572 = vand.u32 %v2383, 4294901760
        %v2573 = vsub.f32 %v2383, %v2572
        %v2574 = vand.u32 %v2573, 4294901760
        %v2575 = vsub.f32 %v2573, %v2574
        %v2576 = vand.u32 %v2575, 4294901760
        %2577 = vmatpush.msra.mxu0 %v2576
        %v2578 = vand.u32 %v2379, 4294901760
        %2579 = vmatmul.f32.gmra.mxu0 %v2578
        %v2580 = vpop.f32.mrf.mxu0
        %v2581 = vadd.f32 %v2555, %v2580
        %2582 = vdwg.mxu0
        %2583 = vmatpush.msra.mxu0 0.0
        %2584 = vmatpush.msra.mxu0 0.0
        %2585 = vmatpush.msra.mxu0 0.0
        %2586 = vmatpush.msra.mxu0 0.0
        %2587 = vmatpush.msra.mxu0 0.0
        %2588 = vmatpush.msra.mxu0 0.0
        %2589 = vmatpush.msra.mxu0 0.0
        %2590 = vmatpush.msra.mxu0 0.0
        %2591 = vmatpush.msra.mxu0 0.0
        %2592 = vmatpush.msra.mxu0 0.0
        %2593 = vmatpush.msra.mxu0 0.0
        %2594 = vmatpush.msra.mxu0 0.0
        %2595 = vmatpush.msra.mxu0 0.0
        %2596 = vmatpush.msra.mxu0 0.0
        %2597 = vmatpush.msra.mxu0 0.0
        %v2598 = vand.u32 %v2383, 4294901760
        %v2599 = vsub.f32 %v2383, %v2598
        %2600 = vmatpush.msra.mxu0 %v2599
        %v2601 = vand.u32 %v2379, 4294901760
        %v2602 = vsub.f32 %v2379, %v2601
        %2603 = vmatmul.f32.gmra.mxu0 %v2602
        %v2604 = vpop.f32.mrf.mxu0
        %v2605 = vadd.f32 %v2581, %v2604
        %2606 = vdwg.mxu0
        %2607 = vmatpush.msra.mxu0 0.0
        %2608 = vmatpush.msra.mxu0 0.0
        %2609 = vmatpush.msra.mxu0 0.0
        %2610 = vmatpush.msra.mxu0 0.0
        %2611 = vmatpush.msra.mxu0 0.0
        %2612 = vmatpush.msra.mxu0 0.0
        %2613 = vmatpush.msra.mxu0 0.0
        %2614 = vmatpush.msra.mxu0 0.0
        %2615 = vmatpush.msra.mxu0 0.0
        %2616 = vmatpush.msra.mxu0 0.0
        %2617 = vmatpush.msra.mxu0 0.0
        %2618 = vmatpush.msra.mxu0 0.0
        %2619 = vmatpush.msra.mxu0 0.0
        %2620 = vmatpush.msra.mxu0 0.0
        %2621 = vmatpush.msra.mxu0 0.0
        %v2622 = vand.u32 %v2383, 4294901760
        %2623 = vmatpush.msra.mxu0 %v2622
        %v2624 = vand.u32 %v2379, 4294901760
        %v2625 = vsub.f32 %v2379, %v2624
        %v2626 = vand.u32 %v2625, 4294901760
        %2627 = vmatmul.f32.gmra.mxu0 %v2626
        %v2628 = vpop.f32.mrf.mxu0
        %v2629 = vadd.f32 %v2605, %v2628
        %2630 = vdwg.mxu0
        %2631 = vmatpush.msra.mxu0 0.0
        %2632 = vmatpush.msra.mxu0 0.0
        %2633 = vmatpush.msra.mxu0 0.0
        %2634 = vmatpush.msra.mxu0 0.0
        %2635 = vmatpush.msra.mxu0 0.0
        %2636 = vmatpush.msra.mxu0 0.0
        %2637 = vmatpush.msra.mxu0 0.0
        %2638 = vmatpush.msra.mxu0 0.0
        %2639 = vmatpush.msra.mxu0 0.0
        %2640 = vmatpush.msra.mxu0 0.0
        %2641 = vmatpush.msra.mxu0 0.0
        %2642 = vmatpush.msra.mxu0 0.0
        %2643 = vmatpush.msra.mxu0 0.0
        %2644 = vmatpush.msra.mxu0 0.0
        %2645 = vmatpush.msra.mxu0 0.0
        %v2646 = vand.u32 %v2383, 4294901760
        %v2647 = vsub.f32 %v2383, %v2646
        %v2648 = vand.u32 %v2647, 4294901760
        %2649 = vmatpush.msra.mxu0 %v2648
        %v2650 = vand.u32 %v2379, 4294901760
        %2651 = vmatmul.f32.gmra.mxu0 %v2650
        %v2652 = vpop.f32.mrf.mxu0
        %v2653 = vadd.f32 %v2629, %v2652
        %2654 = vdwg.mxu0
        %2655 = vmatpush.msra.mxu0 0.0
        %2656 = vmatpush.msra.mxu0 0.0
        %2657 = vmatpush.msra.mxu0 0.0
        %2658 = vmatpush.msra.mxu0 0.0
        %2659 = vmatpush.msra.mxu0 0.0
        %2660 = vmatpush.msra.mxu0 0.0
        %2661 = vmatpush.msra.mxu0 0.0
        %2662 = vmatpush.msra.mxu0 0.0
        %2663 = vmatpush.msra.mxu0 0.0
        %2664 = vmatpush.msra.mxu0 0.0
        %2665 = vmatpush.msra.mxu0 0.0
        %2666 = vmatpush.msra.mxu0 0.0
        %2667 = vmatpush.msra.mxu0 0.0
        %2668 = vmatpush.msra.mxu0 0.0
        %2669 = vmatpush.msra.mxu0 0.0
        %v2670 = vand.u32 %v2383, 4294901760
        %2671 = vmatpush.msra.mxu0 %v2670
        %v2672 = vand.u32 %v2379, 4294901760
        %2673 = vmatmul.f32.gmra.mxu0 %v2672
        %v2674 = vpop.f32.mrf.mxu0
        %v2675 = vadd.f32 %v2653, %v2674
        %2676 = vdwg.mxu0
        %v2677 = vadd.f32 %v2355, %v2529
        %v2678 = vadd.f32 %v2356, %v2675
        %v2679 = vld [vmem:[%s168] sm:$0xff]
        %v2680 = vld [vmem:[%s168 + $0x8] sm:$0xf]
        %s2681 = scalar_lea.vmem %s1, 32
        %v2682 = vld [vmem:[%s2681] sm:$0xf]
        %2685 = vst [vmem:[#allocation1] ss:$2 sm:$0xff] %v2679
        %s2686 = scalar_lea.vmem [#allocation1], 16
        %2687 = vst [vmem:[%s2686] ss:$2 sm:$0xff] %v2680
        %v2688 = vld.sshfl [vmem:[#allocation1] sm:$0xff pattern:$0x75316420]
        %v2689 = vld.sshfl [vmem:[#allocation1 + $0x8] sm:$0xff pattern:$0x75316420]
        %v2690 = vld.sshfl [vmem:[#allocation1 + $0x10] sm:$0xff pattern:$0x75316420]
        %2691 = vrot.lane.b32.xlu0 %v2688, 94
        %v2692 = vpop.permute.xlu0 %2691
        %2693 = vrot.lane.b32.xlu0 %v2689, 94
        %v2694 = vpop.permute.xlu0 %2693
        %2695 = vrot.lane.b32.xlu0 %v2690, 94
        %v2696 = vpop.permute.xlu0 %2695
        %vm2697 = vcmask 769024
        %v2698 = vsel %vm2697, %v2692, %v2694
        %v2699 = vsel %vm2697, %v2694, %v2696
        %v2701 = vsel %vm184, %v2682, 0
        %v2703 = vsel %vm188, %v2698, 0
        %v2705 = vsel %vm188, %v2699, 0
        %2707 = vmatpush.msra.mxu0 0.0
        %2708 = vmatpush.msra.mxu0 0.0
        %2709 = vmatpush.msra.mxu0 0.0
        %2710 = vmatpush.msra.mxu0 0.0
        %2711 = vmatpush.msra.mxu0 0.0
        %2712 = vmatpush.msra.mxu0 0.0
        %2713 = vmatpush.msra.mxu0 0.0
        %2714 = vmatpush.msra.mxu0 0.0
        %2715 = vmatpush.msra.mxu0 0.0
        %2716 = vmatpush.msra.mxu0 0.0
        %2717 = vmatpush.msra.mxu0 0.0
        %2718 = vmatpush.msra.mxu0 0.0
        %2719 = vmatpush.msra.mxu0 0.0
        %2720 = vmatpush.msra.mxu0 0.0
        %2721 = vmatpush.msra.mxu0 0.0
        %v2722 = vand.u32 %v2703, 4294901760
        %2723 = vmatpush.msra.mxu0 %v2722
        %v2724 = vand.u32 %v2701, 4294901760
        %v2725 = vsub.f32 %v2701, %v2724
        %v2726 = vand.u32 %v2725, 4294901760
        %v2727 = vsub.f32 %v2725, %v2726
        %v2728 = vand.u32 %v2727, 4294901760
        %2729 = vmatmul.f32.gmra.mxu0 %v2728
        %v2730 = vpop.f32.mrf.mxu0
        %v2731 = vadd.f32 0.0, %v2730
        %2732 = vdwg.mxu0
        %2733 = vmatpush.msra.mxu0 0.0
        %2734 = vmatpush.msra.mxu0 0.0
        %2735 = vmatpush.msra.mxu0 0.0
        %2736 = vmatpush.msra.mxu0 0.0
        %2737 = vmatpush.msra.mxu0 0.0
        %2738 = vmatpush.msra.mxu0 0.0
        %2739 = vmatpush.msra.mxu0 0.0
        %2740 = vmatpush.msra.mxu0 0.0
        %2741 = vmatpush.msra.mxu0 0.0
        %2742 = vmatpush.msra.mxu0 0.0
        %2743 = vmatpush.msra.mxu0 0.0
        %2744 = vmatpush.msra.mxu0 0.0
        %2745 = vmatpush.msra.mxu0 0.0
        %2746 = vmatpush.msra.mxu0 0.0
        %2747 = vmatpush.msra.mxu0 0.0
        %v2748 = vand.u32 %v2703, 4294901760
        %v2749 = vsub.f32 %v2703, %v2748
        %v2750 = vand.u32 %v2749, 4294901760
        %v2751 = vsub.f32 %v2749, %v2750
        %v2752 = vand.u32 %v2751, 4294901760
        %2753 = vmatpush.msra.mxu0 %v2752
        %v2754 = vand.u32 %v2701, 4294901760
        %2755 = vmatmul.f32.gmra.mxu0 %v2754
        %v2756 = vpop.f32.mrf.mxu0
        %v2757 = vadd.f32 %v2731, %v2756
        %2758 = vdwg.mxu0
        %2759 = vmatpush.msra.mxu0 0.0
        %2760 = vmatpush.msra.mxu0 0.0
        %2761 = vmatpush.msra.mxu0 0.0
        %2762 = vmatpush.msra.mxu0 0.0
        %2763 = vmatpush.msra.mxu0 0.0
        %2764 = vmatpush.msra.mxu0 0.0
        %2765 = vmatpush.msra.mxu0 0.0
        %2766 = vmatpush.msra.mxu0 0.0
        %2767 = vmatpush.msra.mxu0 0.0
        %2768 = vmatpush.msra.mxu0 0.0
        %2769 = vmatpush.msra.mxu0 0.0
        %2770 = vmatpush.msra.mxu0 0.0
        %2771 = vmatpush.msra.mxu0 0.0
        %2772 = vmatpush.msra.mxu0 0.0
        %2773 = vmatpush.msra.mxu0 0.0
        %v2774 = vand.u32 %v2703, 4294901760
        %v2775 = vsub.f32 %v2703, %v2774
        %2776 = vmatpush.msra.mxu0 %v2775
        %v2777 = vand.u32 %v2701, 4294901760
        %v2778 = vsub.f32 %v2701, %v2777
        %2779 = vmatmul.f32.gmra.mxu0 %v2778
        %v2780 = vpop.f32.mrf.mxu0
        %v2781 = vadd.f32 %v2757, %v2780
        %2782 = vdwg.mxu0
        %2783 = vmatpush.msra.mxu0 0.0
        %2784 = vmatpush.msra.mxu0 0.0
        %2785 = vmatpush.msra.mxu0 0.0
        %2786 = vmatpush.msra.mxu0 0.0
        %2787 = vmatpush.msra.mxu0 0.0
        %2788 = vmatpush.msra.mxu0 0.0
        %2789 = vmatpush.msra.mxu0 0.0
        %2790 = vmatpush.msra.mxu0 0.0
        %2791 = vmatpush.msra.mxu0 0.0
        %2792 = vmatpush.msra.mxu0 0.0
        %2793 = vmatpush.msra.mxu0 0.0
        %2794 = vmatpush.msra.mxu0 0.0
        %2795 = vmatpush.msra.mxu0 0.0
        %2796 = vmatpush.msra.mxu0 0.0
        %2797 = vmatpush.msra.mxu0 0.0
        %v2798 = vand.u32 %v2703, 4294901760
        %2799 = vmatpush.msra.mxu0 %v2798
        %v2800 = vand.u32 %v2701, 4294901760
        %v2801 = vsub.f32 %v2701, %v2800
        %v2802 = vand.u32 %v2801, 4294901760
        %2803 = vmatmul.f32.gmra.mxu0 %v2802
        %v2804 = vpop.f32.mrf.mxu0
        %v2805 = vadd.f32 %v2781, %v2804
        %2806 = vdwg.mxu0
        %2807 = vmatpush.msra.mxu0 0.0
        %2808 = vmatpush.msra.mxu0 0.0
        %2809 = vmatpush.msra.mxu0 0.0
        %2810 = vmatpush.msra.mxu0 0.0
        %2811 = vmatpush.msra.mxu0 0.0
        %2812 = vmatpush.msra.mxu0 0.0
        %2813 = vmatpush.msra.mxu0 0.0
        %2814 = vmatpush.msra.mxu0 0.0
        %2815 = vmatpush.msra.mxu0 0.0
        %2816 = vmatpush.msra.mxu0 0.0
        %2817 = vmatpush.msra.mxu0 0.0
        %2818 = vmatpush.msra.mxu0 0.0
        %2819 = vmatpush.msra.mxu0 0.0
        %2820 = vmatpush.msra.mxu0 0.0
        %2821 = vmatpush.msra.mxu0 0.0
        %v2822 = vand.u32 %v2703, 4294901760
        %v2823 = vsub.f32 %v2703, %v2822
        %v2824 = vand.u32 %v2823, 4294901760
        %2825 = vmatpush.msra.mxu0 %v2824
        %v2826 = vand.u32 %v2701, 4294901760
        %2827 = vmatmul.f32.gmra.mxu0 %v2826
        %v2828 = vpop.f32.mrf.mxu0
        %v2829 = vadd.f32 %v2805, %v2828
        %2830 = vdwg.mxu0
        %2831 = vmatpush.msra.mxu0 0.0
        %2832 = vmatpush.msra.mxu0 0.0
        %2833 = vmatpush.msra.mxu0 0.0
        %2834 = vmatpush.msra.mxu0 0.0
        %2835 = vmatpush.msra.mxu0 0.0
        %2836 = vmatpush.msra.mxu0 0.0
        %2837 = vmatpush.msra.mxu0 0.0
        %2838 = vmatpush.msra.mxu0 0.0
        %2839 = vmatpush.msra.mxu0 0.0
        %2840 = vmatpush.msra.mxu0 0.0
        %2841 = vmatpush.msra.mxu0 0.0
        %2842 = vmatpush.msra.mxu0 0.0
        %2843 = vmatpush.msra.mxu0 0.0
        %2844 = vmatpush.msra.mxu0 0.0
        %2845 = vmatpush.msra.mxu0 0.0
        %v2846 = vand.u32 %v2703, 4294901760
        %2847 = vmatpush.msra.mxu0 %v2846
        %v2848 = vand.u32 %v2701, 4294901760
        %2849 = vmatmul.f32.gmra.mxu0 %v2848
        %v2850 = vpop.f32.mrf.mxu0
        %v2851 = vadd.f32 %v2829, %v2850
        %2852 = vdwg.mxu0
        %2853 = vmatpush.msra.mxu0 0.0
        %2854 = vmatpush.msra.mxu0 0.0
        %2855 = vmatpush.msra.mxu0 0.0
        %2856 = vmatpush.msra.mxu0 0.0
        %2857 = vmatpush.msra.mxu0 0.0
        %2858 = vmatpush.msra.mxu0 0.0
        %2859 = vmatpush.msra.mxu0 0.0
        %2860 = vmatpush.msra.mxu0 0.0
        %2861 = vmatpush.msra.mxu0 0.0
        %2862 = vmatpush.msra.mxu0 0.0
        %2863 = vmatpush.msra.mxu0 0.0
        %2864 = vmatpush.msra.mxu0 0.0
        %2865 = vmatpush.msra.mxu0 0.0
        %2866 = vmatpush.msra.mxu0 0.0
        %2867 = vmatpush.msra.mxu0 0.0
        %v2868 = vand.u32 %v2705, 4294901760
        %2869 = vmatpush.msra.mxu0 %v2868
        %v2870 = vand.u32 %v2701, 4294901760
        %v2871 = vsub.f32 %v2701, %v2870
        %v2872 = vand.u32 %v2871, 4294901760
        %v2873 = vsub.f32 %v2871, %v2872
        %v2874 = vand.u32 %v2873, 4294901760
        %2875 = vmatmul.f32.gmra.mxu0 %v2874
        %v2876 = vpop.f32.mrf.mxu0
        %v2877 = vadd.f32 0.0, %v2876
        %2878 = vdwg.mxu0
        %2879 = vmatpush.msra.mxu0 0.0
        %2880 = vmatpush.msra.mxu0 0.0
        %2881 = vmatpush.msra.mxu0 0.0
        %2882 = vmatpush.msra.mxu0 0.0
        %2883 = vmatpush.msra.mxu0 0.0
        %2884 = vmatpush.msra.mxu0 0.0
        %2885 = vmatpush.msra.mxu0 0.0
        %2886 = vmatpush.msra.mxu0 0.0
        %2887 = vmatpush.msra.mxu0 0.0
        %2888 = vmatpush.msra.mxu0 0.0
        %2889 = vmatpush.msra.mxu0 0.0
        %2890 = vmatpush.msra.mxu0 0.0
        %2891 = vmatpush.msra.mxu0 0.0
        %2892 = vmatpush.msra.mxu0 0.0
        %2893 = vmatpush.msra.mxu0 0.0
        %v2894 = vand.u32 %v2705, 4294901760
        %v2895 = vsub.f32 %v2705, %v2894
        %v2896 = vand.u32 %v2895, 4294901760
        %v2897 = vsub.f32 %v2895, %v2896
        %v2898 = vand.u32 %v2897, 4294901760
        %2899 = vmatpush.msra.mxu0 %v2898
        %v2900 = vand.u32 %v2701, 4294901760
        %2901 = vmatmul.f32.gmra.mxu0 %v2900
        %v2902 = vpop.f32.mrf.mxu0
        %v2903 = vadd.f32 %v2877, %v2902
        %2904 = vdwg.mxu0
        %2905 = vmatpush.msra.mxu0 0.0
        %2906 = vmatpush.msra.mxu0 0.0
        %2907 = vmatpush.msra.mxu0 0.0
        %2908 = vmatpush.msra.mxu0 0.0
        %2909 = vmatpush.msra.mxu0 0.0
        %2910 = vmatpush.msra.mxu0 0.0
        %2911 = vmatpush.msra.mxu0 0.0
        %2912 = vmatpush.msra.mxu0 0.0
        %2913 = vmatpush.msra.mxu0 0.0
        %2914 = vmatpush.msra.mxu0 0.0
        %2915 = vmatpush.msra.mxu0 0.0
        %2916 = vmatpush.msra.mxu0 0.0
        %2917 = vmatpush.msra.mxu0 0.0
        %2918 = vmatpush.msra.mxu0 0.0
        %2919 = vmatpush.msra.mxu0 0.0
        %v2920 = vand.u32 %v2705, 4294901760
        %v2921 = vsub.f32 %v2705, %v2920
        %2922 = vmatpush.msra.mxu0 %v2921
        %v2923 = vand.u32 %v2701, 4294901760
        %v2924 = vsub.f32 %v2701, %v2923
        %2925 = vmatmul.f32.gmra.mxu0 %v2924
        %v2926 = vpop.f32.mrf.mxu0
        %v2927 = vadd.f32 %v2903, %v2926
        %2928 = vdwg.mxu0
        %2929 = vmatpush.msra.mxu0 0.0
        %2930 = vmatpush.msra.mxu0 0.0
        %2931 = vmatpush.msra.mxu0 0.0
        %2932 = vmatpush.msra.mxu0 0.0
        %2933 = vmatpush.msra.mxu0 0.0
        %2934 = vmatpush.msra.mxu0 0.0
        %2935 = vmatpush.msra.mxu0 0.0
        %2936 = vmatpush.msra.mxu0 0.0
        %2937 = vmatpush.msra.mxu0 0.0
        %2938 = vmatpush.msra.mxu0 0.0
        %2939 = vmatpush.msra.mxu0 0.0
        %2940 = vmatpush.msra.mxu0 0.0
        %2941 = vmatpush.msra.mxu0 0.0
        %2942 = vmatpush.msra.mxu0 0.0
        %2943 = vmatpush.msra.mxu0 0.0
        %v2944 = vand.u32 %v2705, 4294901760
        %2945 = vmatpush.msra.mxu0 %v2944
        %v2946 = vand.u32 %v2701, 4294901760
        %v2947 = vsub.f32 %v2701, %v2946
        %v2948 = vand.u32 %v2947, 4294901760
        %2949 = vmatmul.f32.gmra.mxu0 %v2948
        %v2950 = vpop.f32.mrf.mxu0
        %v2951 = vadd.f32 %v2927, %v2950
        %2952 = vdwg.mxu0
        %2953 = vmatpush.msra.mxu0 0.0
        %2954 = vmatpush.msra.mxu0 0.0
        %2955 = vmatpush.msra.mxu0 0.0
        %2956 = vmatpush.msra.mxu0 0.0
        %2957 = vmatpush.msra.mxu0 0.0
        %2958 = vmatpush.msra.mxu0 0.0
        %2959 = vmatpush.msra.mxu0 0.0
        %2960 = vmatpush.msra.mxu0 0.0
        %2961 = vmatpush.msra.mxu0 0.0
        %2962 = vmatpush.msra.mxu0 0.0
        %2963 = vmatpush.msra.mxu0 0.0
        %2964 = vmatpush.msra.mxu0 0.0
        %2965 = vmatpush.msra.mxu0 0.0
        %2966 = vmatpush.msra.mxu0 0.0
        %2967 = vmatpush.msra.mxu0 0.0
        %v2968 = vand.u32 %v2705, 4294901760
        %v2969 = vsub.f32 %v2705, %v2968
        %v2970 = vand.u32 %v2969, 4294901760
        %2971 = vmatpush.msra.mxu0 %v2970
        %v2972 = vand.u32 %v2701, 4294901760
        %2973 = vmatmul.f32.gmra.mxu0 %v2972
        %v2974 = vpop.f32.mrf.mxu0
        %v2975 = vadd.f32 %v2951, %v2974
        %2976 = vdwg.mxu0
        %2977 = vmatpush.msra.mxu0 0.0
        %2978 = vmatpush.msra.mxu0 0.0
        %2979 = vmatpush.msra.mxu0 0.0
        %2980 = vmatpush.msra.mxu0 0.0
        %2981 = vmatpush.msra.mxu0 0.0
        %2982 = vmatpush.msra.mxu0 0.0
        %2983 = vmatpush.msra.mxu0 0.0
        %2984 = vmatpush.msra.mxu0 0.0
        %2985 = vmatpush.msra.mxu0 0.0
        %2986 = vmatpush.msra.mxu0 0.0
        %2987 = vmatpush.msra.mxu0 0.0
        %2988 = vmatpush.msra.mxu0 0.0
        %2989 = vmatpush.msra.mxu0 0.0
        %2990 = vmatpush.msra.mxu0 0.0
        %2991 = vmatpush.msra.mxu0 0.0
        %v2992 = vand.u32 %v2705, 4294901760
        %2993 = vmatpush.msra.mxu0 %v2992
        %v2994 = vand.u32 %v2701, 4294901760
        %2995 = vmatmul.f32.gmra.mxu0 %v2994
        %v2996 = vpop.f32.mrf.mxu0
        %v2997 = vadd.f32 %v2975, %v2996
        %2998 = vdwg.mxu0
        %v2999 = vadd.f32 %v2677, %v2851
        %v3000 = vadd.f32 %v2678, %v2997
        %v3003 = vrot.slane %v2999, 4
        %v3004 = vrot.slane %v3000, 4
        %v3007 = vsel %vm188, %v2999, %v3003
        %v3008 = vsel %vm188, %v3000, %v3004
        %3010 = vset.pattern.permute.xlu0 0
        %3011 = vperm.xlu0 %3010, %v169
        %v3012 = vpop.permute.xlu0 %3011
        %v3014 = vadd.f32 %v3007, %v3012
        %v3015 = vadd.f32 %v3008, %v3012
        %3016 = vst [vmem:[%s163] sm:$0xff] %v3014
        %3017 = vst.msk [vmem:[%s163 + $0x8] sm:$0xff] %vm2054, %v3015
        %s3018 = sand.u32 %s93, 1
        %s3019 = scalar_lea.sflag [#allocation3], %s3018
        %s3020 = sand.u32 %s93, 1
        %s3021 = smul.addr %s3020, 16
        %s3022 = scalar_lea.vmem [#allocation2], %s3021
        // Predicated region
        $region33: #{tpu_custom_call.1} parent=31 // pred_check
          %p3023 = pneg %p103
        $region34: #{tpu_custom_call.1} parent=31 // pred_check_branch
          %3025 = sbr.rel (%p3023) target = $region36
        $region35: #{tpu_custom_call.1} parent=31 // pred_region
          %3027 = vsyncadd %s3019, 0
          %s3028 = smul.addr %s17, 2
          %s3029 = smul.addr %s3028, 8
          %s3030 = scalar_lea.hbm %s3, %s3029
          %s3032 = sshll.u32 %s3022, 4
          %s3033 = int_to_ptr.vmem [resolvable:$true] %s3032
          %s3034 = sshll.u32 %s3030, 4
          %s3035 = int_to_ptr.hbm [resolvable:$true] %s3034
          %3037 = dma.vmem_to_hbm [thread:$0]  %s3033, 256, %s3035, %s3019
        $region36: #{tpu_custom_call.1} parent=31 // pred_fallthru
          _
      $region32: #{tpu_custom_call.1} parent=5 // pred_fallthru
        _
      %p3038 = scmp.le.s32.totalorder 2, %s12
      // Predicated region
      $region37: #{tpu_custom_call.1} parent=5 // pred_check
        %p3039 = pneg %p3038
      $region38: #{tpu_custom_call.1} parent=5 // pred_check_branch
        %3041 = sbr.rel (%p3039) target = $region40
      $region39: #{tpu_custom_call.1} parent=5 // pred_region
        %s3042 = ssub.s32 %s12, 2
        // Predicated region
        $region41: #{tpu_custom_call.1} parent=39 // pred_check
          %p3043 = pneg %p109
        $region42: #{tpu_custom_call.1} parent=39 // pred_check_branch
          %3045 = sbr.rel (%p3043) target = $region44
        $region43: #{tpu_custom_call.1} parent=39 // pred_region
          %s3046 = sand.u32 %s94, 1
          %s3047 = scalar_lea.sflag [#allocation3], %s3046
          %s3048 = sand.u32 %s94, 1
          %s3049 = smul.addr %s3048, 16
          %s3050 = scalar_lea.vmem [#allocation2], %s3049
          %3052 = dma.done %s3047, 256
        $region44: #{tpu_custom_call.1} parent=39 // pred_fallthru
          _
      $region40: #{tpu_custom_call.1} parent=5 // pred_fallthru
        _
    $region6: #{tpu_custom_call.1} parent=1 // loop_footer
      %s16 = sadd.s32 1, %s12
    $region7: #{tpu_custom_call.1} parent=1 // loop_footer_branch
      %11 = sbr.rel target = $region3
    $region8: #{tpu_custom_call.1} parent=1 // loop_exit
      _
    %3053 = vsyncpa [#allocation3], 1
    %s3054 = scalar_lea.sflag [#allocation3], 1
    %3055 = vsyncpa %s3054, 1

</llo_original>
